<compile_context>
chip_gen: v7x
topology: tpu7x:2x2x1
jax: 0.10.0
libtpu: 0.0.40
codegen_flags: <defaults>
</compile_context>

<pallas_src>
import functools

import jax
import jax.numpy as jnp
import numpy as np
from jax.experimental import pallas as pl
from jax.experimental.pallas import tpu as pltpu


def _pgnn_layer_kernel(gsub_ref, slab_ref, rexp_ref, w2exp_ref, whb_ref,
                       bias_ref, pout_ref, obias_ref, out_ref):
    """One PGNN layer over a TN-row block of nodes (all M anchor sets at once).

    gsub_ref : [TN, MD]  f32  gathered, Wa-folded messages  (MD = M*Dout; dominant DMA)
    slab_ref : [TN, PW]  f32  packed per-row inputs: feat in lanes [0,Din), dmax in [Din,Din+M)
    rexp_ref : [PW, MD]  f32  0/1: selects dmax lane of anchor m, expands to Dout lanes
    w2exp_ref: [MD, MD]  f32  block-diagonal w2 (Nonlinear reduce) replicated Dout-wide
    whb_ref  : [PW, MD]  f32  self-feature half of linear_hidden, tiled over anchor sets
    bias_ref : [4, MD]   f32  rows: w1_tile, b1_tile, b2_bcast, bh_tile
    pout_ref : [MD, OW]  f32  heads: wp block-diag -> lanes [0,M); 1/M stacked-eye -> [M,M+Dout)
    obias_ref: [1, OW]   f32  bp in lanes [0,M)
    out_ref  : [TN, OW]  f32  lane-dense slab: [:, :M] = pos, [:, M:M+Dout] = struct
    """
    slab = slab_ref[...]                                            # [TN, PW]
    gsub = gsub_ref[...]                                            # [TN, MD]

    # trainable distance transform d' for all anchor sets, pre-expanded to Dout lanes
    dmax_rep = jnp.dot(slab, rexp_ref[...],
                       preferred_element_type=jnp.float32)          # [TN, MD]
    hd = jnp.maximum(dmax_rep * bias_ref[0:1, :] + bias_ref[1:2, :], 0.0)
    d_tr = jnp.dot(hd, w2exp_ref[...],
                   preferred_element_type=jnp.float32) + bias_ref[2:3, :]

    # hidden = relu(msg @ Wa + self @ Wb + bh); msg @ Wa is pre-folded into gsub
    self_h = jnp.dot(slab, whb_ref[...],
                     preferred_element_type=jnp.float32)            # [TN, MD]
    h = jnp.maximum(gsub * d_tr + self_h + bias_ref[3:4, :], 0.0)   # [TN, MD]

    # pos head + struct mean + output placement in a single MXU matmul,
    # stored as one full-width unmasked lane-dense slab.
    out_ref[...] = (jnp.dot(h, pout_ref[...],
                            preferred_element_type=jnp.float32) + obias_ref[...])


def _round_up(x, d):
    return ((x + d - 1) // d) * d


def pgnn_layer(feat, dmax, argmax, params, d_out, tn):
    """One PGNN layer.  feat: [N, Din] f32, dmax: [N, M] f32, argmax: [N, M] i32.
    Returns (pos [N, M] f32, struct [N, Dout] f32)."""
    n, d_in = feat.shape
    _, m = dmax.shape
    w1, b1, w2, b2, wh, bh, wp, bp = params
    dh = w1.shape[1]
    assert dh == d_out, "PGNN's Nonlinear hidden width equals the layer output width"

    md = m * d_out                                   # hidden-slab lane width
    pw = _round_up(d_in + m, 128)                    # packed per-row input width
    ow = _round_up(m + d_out, 128)                   # lane-dense output slab width

    # ---- wrapper-side gather (XLA) with the message half of linear_hidden folded in:
    #        (feat[argmax] * d') @ Wa == (feat @ Wa)[argmax] * d'
    g = jnp.dot(feat, wh[:d_in, :])                                  # [N, Dout] f32
    g_sub = jnp.take(g, argmax, axis=0).reshape(n, md)               # [N, M*Dout]

    # ---- packed per-row slab: feat || dmax, lane-padded to PW (one row-blocked stream)
    slab = jnp.zeros((n, pw), jnp.float32)
    slab = slab.at[:, :d_in].set(feat).at[:, d_in:d_in + m].set(dmax)

    # ---- pad node dim to a multiple of the row tile (garbage rows sliced off below)
    n_pad = _round_up(n, tn)
    if n_pad != n:
        pad = n_pad - n
        g_sub = jnp.pad(g_sub, ((0, pad), (0, 0)))
        slab = jnp.pad(slab, ((0, pad), (0, 0)))

    # ---- constant selection / weight slabs (host masks + traced weights) --------
    row = np.arange(md)
    row_m, row_d = row // d_out, row % d_out
    col = np.arange(ow)

    # R_exp: slab lane (Din + m) -> every lane of anchor-set m
    r_exp = jnp.asarray(np.arange(pw)[:, None] == (d_in + row_m)[None, :], jnp.float32)
    # W2_exp: block-diagonal reduce over Dh with w2, result replicated Dout-wide
    bd_mask = jnp.asarray(row_m[:, None] == row_m[None, :], jnp.float32)
    w2_exp = bd_mask * w2[0, row_d][:, None]
    # self half of linear_hidden, tiled M times and embedded in the slab's feat lanes
    whb_slab = jnp.zeros((pw, md), jnp.float32).at[:d_in, :].set(
        jnp.tile(wh[d_in:, :], (1, m)))
    # per-layer vectors packed into one block: w1_tile, b1_tile, b2_bcast, bh_tile
    bias4 = jnp.concatenate(
        [jnp.tile(w1, (1, m)), jnp.tile(b1, (1, m)),
         jnp.full((1, md), b2[0, 0]), jnp.tile(bh, (1, m))], axis=0)  # [4, MD]
    # output placement: wp block-diag into lanes [0,M), (1/M)*stacked-eye into [M,M+Dout)
    p_out = (jnp.asarray(col[None, :] == row_m[:, None], jnp.float32)
             * wp[0, row_d][:, None]
             + jnp.asarray(col[None, :] == (m + row_d)[:, None], jnp.float32) / m)
    obias = jnp.zeros((1, ow), jnp.float32).at[:, :m].set(bp[0, 0])

    rowblk = lambda i: (i, 0)
    const = lambda i: (0, 0)

    out = pl.pallas_call(
        _pgnn_layer_kernel,
        grid=(n_pad // tn,),
        in_specs=[
            pl.BlockSpec((tn, md), rowblk),      # gathered messages (dominant DMA)
            pl.BlockSpec((tn, pw), rowblk),      # packed feat || dmax slab
            pl.BlockSpec((pw, md), const),       # R_exp
            pl.BlockSpec((md, md), const),       # W2_exp
            pl.BlockSpec((pw, md), const),       # Whb slab
            pl.BlockSpec((4, md), const),        # packed bias vectors
            pl.BlockSpec((md, ow), const),       # heads + placement
            pl.BlockSpec((1, ow), const),        # output bias (bp)
        ],
        out_specs=pl.BlockSpec((tn, ow), rowblk),
        out_shape=jax.ShapeDtypeStruct((n_pad, ow), jnp.float32),
        compiler_params=pltpu.CompilerParams(
            dimension_semantics=("parallel",),        # disjoint row blocks -> both v7x TCs
            vmem_limit_bytes=32 * 1024 * 1024),       # explicit (v5e default scoped = 16 MiB)
    )(g_sub, slab, r_exp, w2_exp, whb_slab, bias4, p_out, obias)

    pos = out[:n, :m]
    struct = out[:n, m:m + d_out]
    return pos, struct


def pgnn_forward(x, dists_max, dists_argmax, params_first, params_out,
                 hidden_dim, output_dim, tn):
    """PGNN with num_layers=2, use_dropout=False (inference), aggr='mean'."""
    _, x_struct = pgnn_layer(x, dists_max, dists_argmax, params_first, hidden_dim, tn)
    x_position, _ = pgnn_layer(x_struct, dists_max, dists_argmax, params_out, output_dim, tn)
    # F.normalize(x_position, p=2, dim=-1)
    norm = jnp.sqrt(jnp.sum(x_position * x_position, axis=-1, keepdims=True))
    return x_position / jnp.maximum(norm, 1e-12)


_pgnn_forward_jit = jax.jit(pgnn_forward, static_argnums=(5, 6, 7))


def position_channel_forward(x, dists_max, dists_argmax, mask_teams,
                             params_first, params_out, hidden_dim, output_dim, tn):
    pos = _pgnn_forward_jit(x, dists_max, dists_argmax, params_first, params_out,
                            hidden_dim, output_dim, tn)
    # boolean-mask row selection (dynamic output shape) -> done eagerly, outside jit/kernel
    return pos[mask_teams]


# ------------------------ pure-JAX reference (for checking) ------------------
def _pgnn_layer_ref(feat, dmax, argmax, params):
    w1, b1, w2, b2, wh, bh, wp, bp = params
    h = jnp.maximum(dmax[..., None] * w1[0] + b1[0], 0.0)
    d_tr = jnp.sum(h * w2[0], axis=-1) + b2[0, 0]                # [N, M]
    subset = feat[argmax]                                         # [N, M, Din]
    messages = subset * d_tr[..., None]
    self_feat = jnp.broadcast_to(feat[:, None, :], subset.shape)
    msgs = jnp.concatenate([messages, self_feat], axis=-1)
    hidden = jnp.maximum(msgs @ wh + bh[0], 0.0)
    pos = jnp.sum(hidden * wp[0], axis=-1) + bp[0, 0]
    struct = jnp.mean(hidden, axis=1)
    return pos, struct


def _pgnn_forward_ref(x, dmax, argmax, p1, p2):
    _, xs = _pgnn_layer_ref(x, dmax, argmax, p1)
    pos, _ = _pgnn_layer_ref(xs, dmax, argmax, p2)
    norm = jnp.sqrt(jnp.sum(pos * pos, axis=-1, keepdims=True))
    return pos / jnp.maximum(norm, 1e-12)


# ------------------------------- setup ---------------------------------------
def _init_layer_params(key, d_in, d_out):
    """PyTorch-Linear-style uniform init, stored pre-transposed for the kernel."""
    ks = jax.random.split(key, 8)
    u = lambda k, shape, fan_in: jax.random.uniform(
        k, shape, jnp.float32, -1.0 / np.sqrt(fan_in), 1.0 / np.sqrt(fan_in))
    w1 = u(ks[0], (1, d_out), 1)               # Nonlinear.linear1 (1 -> d_out), weight^T
    b1 = u(ks[1], (1, d_out), 1)
    w2 = u(ks[2], (1, d_out), d_out)           # Nonlinear.linear2 (d_out -> 1), weight
    b2 = u(ks[3], (1, 1), d_out)
    wh = u(ks[4], (2 * d_in, d_out), 2 * d_in)  # linear_hidden weight^T
    bh = u(ks[5], (1, d_out), 2 * d_in)
    wp = u(ks[6], (1, d_out), d_out)           # linear_out_position weight
    bp = u(ks[7], (1, 1), d_out)
    return (w1, b1, w2, b2, wh, bh, wp, bp)


if __name__ == "__main__":
    # small, module-consistent shapes (exercises padding N=200 -> 256 and a 2-block grid)
    N = 200                # nodes
    INPUT_DIM = 16
    HIDDEN_DIM = 32
    OUTPUT_DIM = 16
    N_ANCHORSETS = 8       # M
    TN = 128               # row tile; keep grid >= 2 blocks so v7x uses both TensorCores

    key = jax.random.PRNGKey(0)
    k_x, k_d, k_a, k_p1, k_p2 = jax.random.split(key, 5)

    x = jax.random.normal(k_x, (N, INPUT_DIM), jnp.float32)
    dists_max = jax.random.uniform(k_d, (N, N_ANCHORSETS), jnp.float32)
    dists_argmax = jax.random.randint(k_a, (N, N_ANCHORSETS), 0, N, jnp.int32)
    mask_teams = (jnp.arange(N) % 3 != 0)          # deterministic boolean mask

    params_first = _init_layer_params(k_p1, INPUT_DIM, HIDDEN_DIM)
    params_out = _init_layer_params(k_p2, HIDDEN_DIM, OUTPUT_DIM)

    out = position_channel_forward(x, dists_max, dists_argmax, mask_teams,
                                   params_first, params_out,
                                   HIDDEN_DIM, OUTPUT_DIM, TN)
    out = jax.block_until_ready(out)

    # correctness check against pure-JAX reference (all-f32 path)
    ref = _pgnn_forward_ref(x, dists_max, dists_argmax, params_first, params_out)[mask_teams]
    np.testing.assert_allclose(np.asarray(out), np.asarray(ref), rtol=1e-2, atol=1e-2)
    assert out.shape == (int(mask_teams.sum()), N_ANCHORSETS)

    print("KERNEL_OK")
</pallas_src>

<mosaic_0001>
module attributes {stable_mosaic.version = 11 : i64} {
  func.func @_pgnn_layer_kernel(%arg0: i32, %arg1: memref<128x256xf32, #tpu.memory_space<vmem>>, %arg2: memref<128x128xf32, #tpu.memory_space<vmem>>, %arg3: memref<128x256xf32, #tpu.memory_space<vmem>>, %arg4: memref<256x256xf32, #tpu.memory_space<vmem>>, %arg5: memref<128x256xf32, #tpu.memory_space<vmem>>, %arg6: memref<4x256xf32, #tpu.memory_space<vmem>>, %arg7: memref<256x128xf32, #tpu.memory_space<vmem>>, %arg8: memref<1x128xf32, #tpu.memory_space<vmem>>, %arg9: memref<128x128xf32, #tpu.memory_space<vmem>>) attributes {dimension_semantics = [#tpu.dimension_semantics<parallel>], iteration_bounds = array<i64: 2>, scalar_prefetch = 0 : i64, scratch_operands = 0 : i64, tpu.core_type = #tpu.core_type<tc>, window_params = [{transform_indices = @transform_0, window_bounds = array<i64: 128, 256>}, {transform_indices = @transform_1, window_bounds = array<i64: 128, 128>}, {pipeline_mode = #tpu.pipeline_mode<synchronous>, transform_indices = @transform_2, window_bounds = array<i64: 128, 256>}, {pipeline_mode = #tpu.pipeline_mode<synchronous>, transform_indices = @transform_3, window_bounds = array<i64: 256, 256>}, {pipeline_mode = #tpu.pipeline_mode<synchronous>, transform_indices = @transform_4, window_bounds = array<i64: 128, 256>}, {pipeline_mode = #tpu.pipeline_mode<synchronous>, transform_indices = @transform_5, window_bounds = array<i64: 4, 256>}, {pipeline_mode = #tpu.pipeline_mode<synchronous>, transform_indices = @transform_6, window_bounds = array<i64: 256, 128>}, {pipeline_mode = #tpu.pipeline_mode<synchronous>, transform_indices = @transform_7, window_bounds = array<i64: 1, 128>}, {transform_indices = @transform_8, window_bounds = array<i64: 128, 128>}]} {
    %c0 = arith.constant 0 : index
    %c0_0 = arith.constant 0 : index
    %0 = vector.load %arg2[%c0, %c0_0] : memref<128x128xf32, #tpu.memory_space<vmem>>, vector<128x128xf32>
    %c0_1 = arith.constant 0 : index
    %c0_2 = arith.constant 0 : index
    %1 = vector.load %arg1[%c0_1, %c0_2] : memref<128x256xf32, #tpu.memory_space<vmem>>, vector<128x256xf32>
    %c0_3 = arith.constant 0 : index
    %c0_4 = arith.constant 0 : index
    %2 = vector.load %arg3[%c0_3, %c0_4] : memref<128x256xf32, #tpu.memory_space<vmem>>, vector<128x256xf32>
    %cst = arith.constant dense<0.000000e+00> : vector<128x256xf32>
    %3 = tpu.matmul %0, %2, %cst {dimension_numbers = #tpu.dot_dimension_numbers<[1], [0], [0], [1], [0, 0, 1, 1], [], []>} : vector<128x128xf32>, vector<128x256xf32>, vector<128x256xf32> -> vector<128x256xf32>
    %c0_5 = arith.constant 0 : index
    %c0_6 = arith.constant 0 : index
    %4 = vector.load %arg6[%c0_5, %c0_6] : memref<4x256xf32, #tpu.memory_space<vmem>>, vector<1x256xf32>
    %5 = vector.broadcast %4 : vector<1x256xf32> to vector<128x256xf32>
    %6 = arith.mulf %3, %5 : vector<128x256xf32>
    %c1 = arith.constant 1 : index
    %c0_7 = arith.constant 0 : index
    %7 = vector.load %arg6[%c1, %c0_7] : memref<4x256xf32, #tpu.memory_space<vmem>>, vector<1x256xf32>
    %8 = vector.broadcast %7 : vector<1x256xf32> to vector<128x256xf32>
    %9 = arith.addf %6, %8 : vector<128x256xf32>
    %cst_8 = arith.constant 0.000000e+00 : f32
    %10 = vector.broadcast %cst_8 : f32 to vector<128x256xf32>
    %11 = arith.maximumf %9, %10 : vector<128x256xf32>
    %c0_9 = arith.constant 0 : index
    %c0_10 = arith.constant 0 : index
    %12 = vector.load %arg4[%c0_9, %c0_10] : memref<256x256xf32, #tpu.memory_space<vmem>>, vector<256x256xf32>
    %cst_11 = arith.constant dense<0.000000e+00> : vector<128x256xf32>
    %13 = tpu.matmul %11, %12, %cst_11 {dimension_numbers = #tpu.dot_dimension_numbers<[1], [0], [0], [1], [0, 0, 1, 1], [], []>} : vector<128x256xf32>, vector<256x256xf32>, vector<128x256xf32> -> vector<128x256xf32>
    %c2 = arith.constant 2 : index
    %c0_12 = arith.constant 0 : index
    %14 = vector.load %arg6[%c2, %c0_12] : memref<4x256xf32, #tpu.memory_space<vmem>>, vector<1x256xf32>
    %15 = vector.broadcast %14 : vector<1x256xf32> to vector<128x256xf32>
    %16 = arith.addf %13, %15 : vector<128x256xf32>
    %c0_13 = arith.constant 0 : index
    %c0_14 = arith.constant 0 : index
    %17 = vector.load %arg5[%c0_13, %c0_14] : memref<128x256xf32, #tpu.memory_space<vmem>>, vector<128x256xf32>
    %cst_15 = arith.constant dense<0.000000e+00> : vector<128x256xf32>
    %18 = tpu.matmul %0, %17, %cst_15 {dimension_numbers = #tpu.dot_dimension_numbers<[1], [0], [0], [1], [0, 0, 1, 1], [], []>} : vector<128x128xf32>, vector<128x256xf32>, vector<128x256xf32> -> vector<128x256xf32>
    %19 = arith.mulf %1, %16 : vector<128x256xf32>
    %20 = arith.addf %19, %18 : vector<128x256xf32>
    %c3 = arith.constant 3 : index
    %c0_16 = arith.constant 0 : index
    %21 = vector.load %arg6[%c3, %c0_16] : memref<4x256xf32, #tpu.memory_space<vmem>>, vector<1x256xf32>
    %22 = vector.broadcast %21 : vector<1x256xf32> to vector<128x256xf32>
    %23 = arith.addf %20, %22 : vector<128x256xf32>
    %cst_17 = arith.constant 0.000000e+00 : f32
    %24 = vector.broadcast %cst_17 : f32 to vector<128x256xf32>
    %25 = arith.maximumf %23, %24 : vector<128x256xf32>
    %c0_18 = arith.constant 0 : index
    %c0_19 = arith.constant 0 : index
    %26 = vector.load %arg7[%c0_18, %c0_19] : memref<256x128xf32, #tpu.memory_space<vmem>>, vector<256x128xf32>
    %cst_20 = arith.constant dense<0.000000e+00> : vector<128x128xf32>
    %27 = tpu.matmul %25, %26, %cst_20 {dimension_numbers = #tpu.dot_dimension_numbers<[1], [0], [0], [1], [0, 0, 1, 1], [], []>} : vector<128x256xf32>, vector<256x128xf32>, vector<128x128xf32> -> vector<128x128xf32>
    %c0_21 = arith.constant 0 : index
    %c0_22 = arith.constant 0 : index
    %28 = vector.load %arg8[%c0_21, %c0_22] : memref<1x128xf32, #tpu.memory_space<vmem>>, vector<1x128xf32>
    %29 = vector.broadcast %28 : vector<1x128xf32> to vector<128x128xf32>
    %30 = arith.addf %27, %29 : vector<128x128xf32>
    %c0_23 = arith.constant 0 : index
    %c0_24 = arith.constant 0 : index
    %31 = vector.load %arg9[%c0_23, %c0_24] : memref<128x128xf32, #tpu.memory_space<vmem>>, vector<128x128xf32>
    tpu.vector_store %arg9[%c0_23, %c0_24], %30 {strides = array<i32>} : memref<128x128xf32, #tpu.memory_space<vmem>>, vector<128x128xf32>,
    return
  }
  func.func @transform_0(%arg0: i32) -> (i32, i32) {
    %c0_i32 = arith.constant 0 : i32
    %c0_i32_0 = arith.constant 0 : i32
    return %arg0, %c0_i32 : i32, i32
  }
  func.func @transform_1(%arg0: i32) -> (i32, i32) {
    %c0_i32 = arith.constant 0 : i32
    %c0_i32_0 = arith.constant 0 : i32
    return %arg0, %c0_i32 : i32, i32
  }
  func.func @transform_2(%arg0: i32) -> (i32, i32) {
    %c0_i32 = arith.constant 0 : i32
    %c0_i32_0 = arith.constant 0 : i32
    %c0_i32_1 = arith.constant 0 : i32
    return %c0_i32, %c0_i32_0 : i32, i32
  }
  func.func @transform_3(%arg0: i32) -> (i32, i32) {
    %c0_i32 = arith.constant 0 : i32
    %c0_i32_0 = arith.constant 0 : i32
    %c0_i32_1 = arith.constant 0 : i32
    return %c0_i32, %c0_i32_0 : i32, i32
  }
  func.func @transform_4(%arg0: i32) -> (i32, i32) {
    %c0_i32 = arith.constant 0 : i32
    %c0_i32_0 = arith.constant 0 : i32
    %c0_i32_1 = arith.constant 0 : i32
    return %c0_i32, %c0_i32_0 : i32, i32
  }
  func.func @transform_5(%arg0: i32) -> (i32, i32) {
    %c0_i32 = arith.constant 0 : i32
    %c0_i32_0 = arith.constant 0 : i32
    %c0_i32_1 = arith.constant 0 : i32
    return %c0_i32, %c0_i32_0 : i32, i32
  }
  func.func @transform_6(%arg0: i32) -> (i32, i32) {
    %c0_i32 = arith.constant 0 : i32
    %c0_i32_0 = arith.constant 0 : i32
    %c0_i32_1 = arith.constant 0 : i32
    return %c0_i32, %c0_i32_0 : i32, i32
  }
  func.func @transform_7(%arg0: i32) -> (i32, i32) {
    %c0_i32 = arith.constant 0 : i32
    %c0_i32_0 = arith.constant 0 : i32
    %c0_i32_1 = arith.constant 0 : i32
    return %c0_i32, %c0_i32_0 : i32, i32
  }
  func.func @transform_8(%arg0: i32) -> (i32, i32) {
    %c0_i32 = arith.constant 0 : i32
    %c0_i32_0 = arith.constant 0 : i32
    return %arg0, %c0_i32 : i32, i32
  }
}

module attributes {stable_mosaic.version = 11 : i64} {
  func.func @_pgnn_layer_kernel(%arg0: i32, %arg1: memref<128x128xf32, #tpu.memory_space<vmem>>, %arg2: memref<128x128xf32, #tpu.memory_space<vmem>>, %arg3: memref<128x128xf32, #tpu.memory_space<vmem>>, %arg4: memref<128x128xf32, #tpu.memory_space<vmem>>, %arg5: memref<128x128xf32, #tpu.memory_space<vmem>>, %arg6: memref<4x128xf32, #tpu.memory_space<vmem>>, %arg7: memref<128x128xf32, #tpu.memory_space<vmem>>, %arg8: memref<1x128xf32, #tpu.memory_space<vmem>>, %arg9: memref<128x128xf32, #tpu.memory_space<vmem>>) attributes {dimension_semantics = [#tpu.dimension_semantics<parallel>], iteration_bounds = array<i64: 2>, scalar_prefetch = 0 : i64, scratch_operands = 0 : i64, tpu.core_type = #tpu.core_type<tc>, window_params = [{transform_indices = @transform_0, window_bounds = array<i64: 128, 128>}, {transform_indices = @transform_1, window_bounds = array<i64: 128, 128>}, {pipeline_mode = #tpu.pipeline_mode<synchronous>, transform_indices = @transform_2, window_bounds = array<i64: 128, 128>}, {pipeline_mode = #tpu.pipeline_mode<synchronous>, transform_indices = @transform_3, window_bounds = array<i64: 128, 128>}, {pipeline_mode = #tpu.pipeline_mode<synchronous>, transform_indices = @transform_4, window_bounds = array<i64: 128, 128>}, {pipeline_mode = #tpu.pipeline_mode<synchronous>, transform_indices = @transform_5, window_bounds = array<i64: 4, 128>}, {pipeline_mode = #tpu.pipeline_mode<synchronous>, transform_indices = @transform_6, window_bounds = array<i64: 128, 128>}, {pipeline_mode = #tpu.pipeline_mode<synchronous>, transform_indices = @transform_7, window_bounds = array<i64: 1, 128>}, {transform_indices = @transform_8, window_bounds = array<i64: 128, 128>}]} {
    %c0 = arith.constant 0 : index
    %c0_0 = arith.constant 0 : index
    %0 = vector.load %arg2[%c0, %c0_0] : memref<128x128xf32, #tpu.memory_space<vmem>>, vector<128x128xf32>
    %c0_1 = arith.constant 0 : index
    %c0_2 = arith.constant 0 : index
    %1 = vector.load %arg1[%c0_1, %c0_2] : memref<128x128xf32, #tpu.memory_space<vmem>>, vector<128x128xf32>
    %c0_3 = arith.constant 0 : index
    %c0_4 = arith.constant 0 : index
    %2 = vector.load %arg3[%c0_3, %c0_4] : memref<128x128xf32, #tpu.memory_space<vmem>>, vector<128x128xf32>
    %cst = arith.constant dense<0.000000e+00> : vector<128x128xf32>
    %3 = tpu.matmul %0, %2, %cst {dimension_numbers = #tpu.dot_dimension_numbers<[1], [0], [0], [1], [0, 0, 1, 1], [], []>} : vector<128x128xf32>, vector<128x128xf32>, vector<128x128xf32> -> vector<128x128xf32>
    %c0_5 = arith.constant 0 : index
    %c0_6 = arith.constant 0 : index
    %4 = vector.load %arg6[%c0_5, %c0_6] : memref<4x128xf32, #tpu.memory_space<vmem>>, vector<1x128xf32>
    %5 = vector.broadcast %4 : vector<1x128xf32> to vector<128x128xf32>
    %6 = arith.mulf %3, %5 : vector<128x128xf32>
    %c1 = arith.constant 1 : index
    %c0_7 = arith.constant 0 : index
    %7 = vector.load %arg6[%c1, %c0_7] : memref<4x128xf32, #tpu.memory_space<vmem>>, vector<1x128xf32>
    %8 = vector.broadcast %7 : vector<1x128xf32> to vector<128x128xf32>
    %9 = arith.addf %6, %8 : vector<128x128xf32>
    %cst_8 = arith.constant 0.000000e+00 : f32
    %10 = vector.broadcast %cst_8 : f32 to vector<128x128xf32>
    %11 = arith.maximumf %9, %10 : vector<128x128xf32>
    %c0_9 = arith.constant 0 : index
    %c0_10 = arith.constant 0 : index
    %12 = vector.load %arg4[%c0_9, %c0_10] : memref<128x128xf32, #tpu.memory_space<vmem>>, vector<128x128xf32>
    %cst_11 = arith.constant dense<0.000000e+00> : vector<128x128xf32>
    %13 = tpu.matmul %11, %12, %cst_11 {dimension_numbers = #tpu.dot_dimension_numbers<[1], [0], [0], [1], [0, 0, 1, 1], [], []>} : vector<128x128xf32>, vector<128x128xf32>, vector<128x128xf32> -> vector<128x128xf32>
    %c2 = arith.constant 2 : index
    %c0_12 = arith.constant 0 : index
    %14 = vector.load %arg6[%c2, %c0_12] : memref<4x128xf32, #tpu.memory_space<vmem>>, vector<1x128xf32>
    %15 = vector.broadcast %14 : vector<1x128xf32> to vector<128x128xf32>
    %16 = arith.addf %13, %15 : vector<128x128xf32>
    %c0_13 = arith.constant 0 : index
    %c0_14 = arith.constant 0 : index
    %17 = vector.load %arg5[%c0_13, %c0_14] : memref<128x128xf32, #tpu.memory_space<vmem>>, vector<128x128xf32>
    %cst_15 = arith.constant dense<0.000000e+00> : vector<128x128xf32>
    %18 = tpu.matmul %0, %17, %cst_15 {dimension_numbers = #tpu.dot_dimension_numbers<[1], [0], [0], [1], [0, 0, 1, 1], [], []>} : vector<128x128xf32>, vector<128x128xf32>, vector<128x128xf32> -> vector<128x128xf32>
    %19 = arith.mulf %1, %16 : vector<128x128xf32>
    %20 = arith.addf %19, %18 : vector<128x128xf32>
    %c3 = arith.constant 3 : index
    %c0_16 = arith.constant 0 : index
    %21 = vector.load %arg6[%c3, %c0_16] : memref<4x128xf32, #tpu.memory_space<vmem>>, vector<1x128xf32>
    %22 = vector.broadcast %21 : vector<1x128xf32> to vector<128x128xf32>
    %23 = arith.addf %20, %22 : vector<128x128xf32>
    %cst_17 = arith.constant 0.000000e+00 : f32
    %24 = vector.broadcast %cst_17 : f32 to vector<128x128xf32>
    %25 = arith.maximumf %23, %24 : vector<128x128xf32>
    %c0_18 = arith.constant 0 : index
    %c0_19 = arith.constant 0 : index
    %26 = vector.load %arg7[%c0_18, %c0_19] : memref<128x128xf32, #tpu.memory_space<vmem>>, vector<128x128xf32>
    %cst_20 = arith.constant dense<0.000000e+00> : vector<128x128xf32>
    %27 = tpu.matmul %25, %26, %cst_20 {dimension_numbers = #tpu.dot_dimension_numbers<[1], [0], [0], [1], [0, 0, 1, 1], [], []>} : vector<128x128xf32>, vector<128x128xf32>, vector<128x128xf32> -> vector<128x128xf32>
    %c0_21 = arith.constant 0 : index
    %c0_22 = arith.constant 0 : index
    %28 = vector.load %arg8[%c0_21, %c0_22] : memref<1x128xf32, #tpu.memory_space<vmem>>, vector<1x128xf32>
    %29 = vector.broadcast %28 : vector<1x128xf32> to vector<128x128xf32>
    %30 = arith.addf %27, %29 : vector<128x128xf32>
    %c0_23 = arith.constant 0 : index
    %c0_24 = arith.constant 0 : index
    %31 = vector.load %arg9[%c0_23, %c0_24] : memref<128x128xf32, #tpu.memory_space<vmem>>, vector<128x128xf32>
    tpu.vector_store %arg9[%c0_23, %c0_24], %30 {strides = array<i32>} : memref<128x128xf32, #tpu.memory_space<vmem>>, vector<128x128xf32>,
    return
  }
  func.func @transform_0(%arg0: i32) -> (i32, i32) {
    %c0_i32 = arith.constant 0 : i32
    %c0_i32_0 = arith.constant 0 : i32
    return %arg0, %c0_i32 : i32, i32
  }
  func.func @transform_1(%arg0: i32) -> (i32, i32) {
    %c0_i32 = arith.constant 0 : i32
    %c0_i32_0 = arith.constant 0 : i32
    return %arg0, %c0_i32 : i32, i32
  }
  func.func @transform_2(%arg0: i32) -> (i32, i32) {
    %c0_i32 = arith.constant 0 : i32
    %c0_i32_0 = arith.constant 0 : i32
    %c0_i32_1 = arith.constant 0 : i32
    return %c0_i32, %c0_i32_0 : i32, i32
  }
  func.func @transform_3(%arg0: i32) -> (i32, i32) {
    %c0_i32 = arith.constant 0 : i32
    %c0_i32_0 = arith.constant 0 : i32
    %c0_i32_1 = arith.constant 0 : i32
    return %c0_i32, %c0_i32_0 : i32, i32
  }
  func.func @transform_4(%arg0: i32) -> (i32, i32) {
    %c0_i32 = arith.constant 0 : i32
    %c0_i32_0 = arith.constant 0 : i32
    %c0_i32_1 = arith.constant 0 : i32
    return %c0_i32, %c0_i32_0 : i32, i32
  }
  func.func @transform_5(%arg0: i32) -> (i32, i32) {
    %c0_i32 = arith.constant 0 : i32
    %c0_i32_0 = arith.constant 0 : i32
    %c0_i32_1 = arith.constant 0 : i32
    return %c0_i32, %c0_i32_0 : i32, i32
  }
  func.func @transform_6(%arg0: i32) -> (i32, i32) {
    %c0_i32 = arith.constant 0 : i32
    %c0_i32_0 = arith.constant 0 : i32
    %c0_i32_1 = arith.constant 0 : i32
    return %c0_i32, %c0_i32_0 : i32, i32
  }
  func.func @transform_7(%arg0: i32) -> (i32, i32) {
    %c0_i32 = arith.constant 0 : i32
    %c0_i32_0 = arith.constant 0 : i32
    %c0_i32_1 = arith.constant 0 : i32
    return %c0_i32, %c0_i32_0 : i32, i32
  }
  func.func @transform_8(%arg0: i32) -> (i32, i32) {
    %c0_i32 = arith.constant 0 : i32
    %c0_i32_0 = arith.constant 0 : i32
    return %arg0, %c0_i32 : i32, i32
  }
}

</mosaic_0001>

<llo_original>
// kernel: pgnn_forward.2
$region0: #{pgnn_forward.2}
  #allocation0 [shape = 'u32[]', space=smem, size = 0x4, offset = 0x4, fixed_abs, tag = 'smem constant byte address 0x4 - core index']
  #allocation1 [shape = 'u32[144,128]{1,0:T(1,128)}', space=vmem, size = 0x12000, scoped, tag = 'internal scratch']
  %s0 = inlined_call_operand.vmem [shape: f32[256,256], index: 0, kind: input, shape index: {}]
  %s1 = inlined_call_operand.vmem [shape: f32[256,128], index: 1, kind: input, shape index: {}]
  %s2 = inlined_call_operand.vmem [shape: f32[128,256], index: 2, kind: input, shape index: {}]
  %s3 = inlined_call_operand.vmem [shape: f32[256,256], index: 3, kind: input, shape index: {}]
  %s4 = inlined_call_operand.vmem [shape: f32[128,256], index: 4, kind: input, shape index: {}]
  %s5 = inlined_call_operand.vmem [shape: f32[4,256], index: 5, kind: input, shape index: {}]
  %s6 = inlined_call_operand.vmem [shape: f32[256,128], index: 6, kind: input, shape index: {}]
  %s7 = inlined_call_operand.vmem [shape: f32[1,128], index: 7, kind: input, shape index: {}]
  %s8 = inlined_call_operand.vmem [shape: f32[256,128], index: 8, kind: output, shape index: {}]
  %s9 = sld [smem:[#allocation0]]
  $region65: #{pgnn_forward.2} parent=0
    _
  %s11 = ssub.s32 1, %s9
  %s12 = scalar_select 0, %s11, %s9
  loop: start=0, step=1, limit=4
  $region2: #{pgnn_forward.2} parent=0 // loop_pre_header
    _
  $region3: #{pgnn_forward.2} parent=0 // loop_header
    %s14 = sphi 0, %s18
    %p15 = scmp.ge.s32.totalorder %s14, 4
    %s24 = sphi 0, %s26
    %s27 = sphi 0, %s24
    %s28 = sphi 0, %s27
    %s44 = sphi 0, %s28
    %s50 = sphi 0, %s52
    %s53 = sphi 0, %s50
    %s54 = sphi 0, %s53
    %s70 = sphi 0, %s54
    %s74 = sphi 0, %s74
    %s76 = sphi 0, %s74
    %s77 = sphi 0, %s76
    %s91 = sphi 0, %s77
    %s95 = sphi 0, %s95
    %s97 = sphi 0, %s95
    %s98 = sphi 0, %s97
    %s112 = sphi 0, %s98
    %s116 = sphi 0, %s116
    %s118 = sphi 0, %s116
    %s119 = sphi 0, %s118
    %s133 = sphi 0, %s119
    %s137 = sphi 0, %s137
    %s139 = sphi 0, %s137
    %s140 = sphi 0, %s139
    %s154 = sphi 0, %s140
    %s158 = sphi 0, %s158
    %s160 = sphi 0, %s158
    %s161 = sphi 0, %s160
    %s175 = sphi 0, %s161
    %s179 = sphi 0, %s179
    %s181 = sphi 0, %s179
    %s182 = sphi 0, %s181
    %s196 = sphi 0, %s182
    %s202 = sphi 0, %s204
    %s205 = sphi 0, %s202
    %s206 = sphi 0, %s205
    %s222 = sphi 0, %s206
  $region4: #{pgnn_forward.2} parent=0 // loop_header_branch
    %17 = sbr.rel (%p15) target = $region8
  $region5: #{pgnn_forward.2} parent=0 // loop_body
    %s19 = ssub.s32 %s14, 1
    %s20 = ssub.s32 %s14, 2
    %s21 = sadd.s32 %s14, 1
    %s22 = ssub.s32 %s14, %s21
    %p23 = scmp.eq.s32.totalorder %s22, 0
    %s25 = sadd.s32 %s24, 1
    %s26 = scalar_select %p23, %s24, %s25
    %p29 = pneg %p23
    %p30 = scmp.eq.s32.totalorder %s14, 1
    %p31 = por %p29, %p30
    %p32 = scmp.ne.s32.totalorder %s24, %s27
    %p33 = scmp.eq.s32.totalorder %s14, 0
    %p34 = por %p32, %p33
    %p35 = scmp.ne.s32.totalorder %s24, %s27
    %p36 = scmp.eq.s32.totalorder %s19, 1
    %p37 = por %p35, %p36
    %p38 = scmp.ne.s32.totalorder %s27, %s28
    %p39 = scmp.eq.s32.totalorder %s19, 0
    %p40 = por %p38, %p39
    %p41 = scmp.ne.s32.totalorder %s27, %s28
    %p42 = scmp.eq.s32.totalorder %s20, 1
    %p43 = por %p41, %p42
    %p45 = scmp.ne.s32.totalorder %s28, %s44
    %p46 = scmp.eq.s32.totalorder %s20, 0
    %p47 = por %p45, %p46
    %s48 = ssub.s32 %s14, %s21
    %p49 = scmp.eq.s32.totalorder %s48, 0
    %s51 = sadd.s32 %s50, 1
    %s52 = scalar_select %p49, %s50, %s51
    %p55 = pneg %p49
    %p56 = scmp.eq.s32.totalorder %s14, 1
    %p57 = por %p55, %p56
    %p58 = scmp.ne.s32.totalorder %s50, %s53
    %p59 = scmp.eq.s32.totalorder %s14, 0
    %p60 = por %p58, %p59
    %p61 = scmp.ne.s32.totalorder %s50, %s53
    %p62 = scmp.eq.s32.totalorder %s19, 1
    %p63 = por %p61, %p62
    %p64 = scmp.ne.s32.totalorder %s53, %s54
    %p65 = scmp.eq.s32.totalorder %s19, 0
    %p66 = por %p64, %p65
    %p67 = scmp.ne.s32.totalorder %s53, %s54
    %p68 = scmp.eq.s32.totalorder %s20, 1
    %p69 = por %p67, %p68
    %p71 = scmp.ne.s32.totalorder %s54, %s70
    %p72 = scmp.eq.s32.totalorder %s20, 0
    %p73 = por %p71, %p72
    %s75 = sadd.s32 %s74, 1
    %p78 = scmp.eq.s32.totalorder %s14, 1
    %p79 = scmp.ne.s32.totalorder %s74, %s76
    %p80 = scmp.eq.s32.totalorder %s14, 0
    %p81 = por %p79, %p80
    %p82 = scmp.ne.s32.totalorder %s74, %s76
    %p83 = scmp.eq.s32.totalorder %s19, 1
    %p84 = por %p82, %p83
    %p85 = scmp.ne.s32.totalorder %s76, %s77
    %p86 = scmp.eq.s32.totalorder %s19, 0
    %p87 = por %p85, %p86
    %p88 = scmp.ne.s32.totalorder %s76, %s77
    %p89 = scmp.eq.s32.totalorder %s20, 1
    %p90 = por %p88, %p89
    %p92 = scmp.ne.s32.totalorder %s77, %s91
    %p93 = scmp.eq.s32.totalorder %s20, 0
    %p94 = por %p92, %p93
    %s96 = sadd.s32 %s95, 1
    %p99 = scmp.eq.s32.totalorder %s14, 1
    %p100 = scmp.ne.s32.totalorder %s95, %s97
    %p101 = scmp.eq.s32.totalorder %s14, 0
    %p102 = por %p100, %p101
    %p103 = scmp.ne.s32.totalorder %s95, %s97
    %p104 = scmp.eq.s32.totalorder %s19, 1
    %p105 = por %p103, %p104
    %p106 = scmp.ne.s32.totalorder %s97, %s98
    %p107 = scmp.eq.s32.totalorder %s19, 0
    %p108 = por %p106, %p107
    %p109 = scmp.ne.s32.totalorder %s97, %s98
    %p110 = scmp.eq.s32.totalorder %s20, 1
    %p111 = por %p109, %p110
    %p113 = scmp.ne.s32.totalorder %s98, %s112
    %p114 = scmp.eq.s32.totalorder %s20, 0
    %p115 = por %p113, %p114
    %s117 = sadd.s32 %s116, 1
    %p120 = scmp.eq.s32.totalorder %s14, 1
    %p121 = scmp.ne.s32.totalorder %s116, %s118
    %p122 = scmp.eq.s32.totalorder %s14, 0
    %p123 = por %p121, %p122
    %p124 = scmp.ne.s32.totalorder %s116, %s118
    %p125 = scmp.eq.s32.totalorder %s19, 1
    %p126 = por %p124, %p125
    %p127 = scmp.ne.s32.totalorder %s118, %s119
    %p128 = scmp.eq.s32.totalorder %s19, 0
    %p129 = por %p127, %p128
    %p130 = scmp.ne.s32.totalorder %s118, %s119
    %p131 = scmp.eq.s32.totalorder %s20, 1
    %p132 = por %p130, %p131
    %p134 = scmp.ne.s32.totalorder %s119, %s133
    %p135 = scmp.eq.s32.totalorder %s20, 0
    %p136 = por %p134, %p135
    %s138 = sadd.s32 %s137, 1
    %p141 = scmp.eq.s32.totalorder %s14, 1
    %p142 = scmp.ne.s32.totalorder %s137, %s139
    %p143 = scmp.eq.s32.totalorder %s14, 0
    %p144 = por %p142, %p143
    %p145 = scmp.ne.s32.totalorder %s137, %s139
    %p146 = scmp.eq.s32.totalorder %s19, 1
    %p147 = por %p145, %p146
    %p148 = scmp.ne.s32.totalorder %s139, %s140
    %p149 = scmp.eq.s32.totalorder %s19, 0
    %p150 = por %p148, %p149
    %p151 = scmp.ne.s32.totalorder %s139, %s140
    %p152 = scmp.eq.s32.totalorder %s20, 1
    %p153 = por %p151, %p152
    %p155 = scmp.ne.s32.totalorder %s140, %s154
    %p156 = scmp.eq.s32.totalorder %s20, 0
    %p157 = por %p155, %p156
    %s159 = sadd.s32 %s158, 1
    %p162 = scmp.eq.s32.totalorder %s14, 1
    %p163 = scmp.ne.s32.totalorder %s158, %s160
    %p164 = scmp.eq.s32.totalorder %s14, 0
    %p165 = por %p163, %p164
    %p166 = scmp.ne.s32.totalorder %s158, %s160
    %p167 = scmp.eq.s32.totalorder %s19, 1
    %p168 = por %p166, %p167
    %p169 = scmp.ne.s32.totalorder %s160, %s161
    %p170 = scmp.eq.s32.totalorder %s19, 0
    %p171 = por %p169, %p170
    %p172 = scmp.ne.s32.totalorder %s160, %s161
    %p173 = scmp.eq.s32.totalorder %s20, 1
    %p174 = por %p172, %p173
    %p176 = scmp.ne.s32.totalorder %s161, %s175
    %p177 = scmp.eq.s32.totalorder %s20, 0
    %p178 = por %p176, %p177
    %s180 = sadd.s32 %s179, 1
    %p183 = scmp.eq.s32.totalorder %s14, 1
    %p184 = scmp.ne.s32.totalorder %s179, %s181
    %p185 = scmp.eq.s32.totalorder %s14, 0
    %p186 = por %p184, %p185
    %p187 = scmp.ne.s32.totalorder %s179, %s181
    %p188 = scmp.eq.s32.totalorder %s19, 1
    %p189 = por %p187, %p188
    %p190 = scmp.ne.s32.totalorder %s181, %s182
    %p191 = scmp.eq.s32.totalorder %s19, 0
    %p192 = por %p190, %p191
    %p193 = scmp.ne.s32.totalorder %s181, %s182
    %p194 = scmp.eq.s32.totalorder %s20, 1
    %p195 = por %p193, %p194
    %p197 = scmp.ne.s32.totalorder %s182, %s196
    %p198 = scmp.eq.s32.totalorder %s20, 0
    %p199 = por %p197, %p198
    %s200 = ssub.s32 %s14, %s21
    %p201 = scmp.eq.s32.totalorder %s200, 0
    %s203 = sadd.s32 %s202, 1
    %s204 = scalar_select %p201, %s202, %s203
    %p207 = pneg %p201
    %p208 = scmp.eq.s32.totalorder %s14, 1
    %p209 = por %p207, %p208
    %p210 = scmp.ne.s32.totalorder %s202, %s205
    %p211 = scmp.eq.s32.totalorder %s14, 0
    %p212 = por %p210, %p211
    %p213 = scmp.ne.s32.totalorder %s202, %s205
    %p214 = scmp.eq.s32.totalorder %s19, 1
    %p215 = por %p213, %p214
    %p216 = scmp.ne.s32.totalorder %s205, %s206
    %p217 = scmp.eq.s32.totalorder %s19, 0
    %p218 = por %p216, %p217
    %p219 = scmp.ne.s32.totalorder %s205, %s206
    %p220 = scmp.eq.s32.totalorder %s20, 1
    %p221 = por %p219, %p220
    %p223 = scmp.ne.s32.totalorder %s206, %s222
    %p224 = scmp.eq.s32.totalorder %s20, 0
    %p225 = por %p223, %p224
    %p226 = scmp.le.s32.totalorder 1, %s14
    %p227 = scmp.lt.s32.totalorder %s14, 3
    %p228 = pnand %p226, %p227
    %p229 = pneg %p228
    // Predicated region
    $region9: #{pgnn_forward.2} parent=5 // pred_check
      _
    $region10: #{pgnn_forward.2} parent=5 // pred_check_branch
      %231 = sbr.rel (%p228) target = $region12
    $region11: #{pgnn_forward.2} parent=5 // pred_region
      %s232 = ssub.s32 %s14, 1
      // Predicated region
      $region13: #{pgnn_forward.2} parent=11 // pred_check
        %p233 = pneg %p87
      $region14: #{pgnn_forward.2} parent=11 // pred_check_branch
        %235 = sbr.rel (%p233) target = $region16
      $region15: #{pgnn_forward.2} parent=11 // pred_region
        _
      $region16: #{pgnn_forward.2} parent=11 // pred_fallthru
        _
      // Predicated region
      $region17: #{pgnn_forward.2} parent=11 // pred_check
        %p236 = pneg %p108
      $region18: #{pgnn_forward.2} parent=11 // pred_check_branch
        %238 = sbr.rel (%p236) target = $region20
      $region19: #{pgnn_forward.2} parent=11 // pred_region
        _
      $region20: #{pgnn_forward.2} parent=11 // pred_fallthru
        _
      // Predicated region
      $region21: #{pgnn_forward.2} parent=11 // pred_check
        %p239 = pneg %p129
      $region22: #{pgnn_forward.2} parent=11 // pred_check_branch
        %241 = sbr.rel (%p239) target = $region24
      $region23: #{pgnn_forward.2} parent=11 // pred_region
        _
      $region24: #{pgnn_forward.2} parent=11 // pred_fallthru
        _
      // Predicated region
      $region25: #{pgnn_forward.2} parent=11 // pred_check
        %p242 = pneg %p150
      $region26: #{pgnn_forward.2} parent=11 // pred_check_branch
        %244 = sbr.rel (%p242) target = $region28
      $region27: #{pgnn_forward.2} parent=11 // pred_region
        _
      $region28: #{pgnn_forward.2} parent=11 // pred_fallthru
        _
      // Predicated region
      $region29: #{pgnn_forward.2} parent=11 // pred_check
        %p245 = pneg %p171
      $region30: #{pgnn_forward.2} parent=11 // pred_check_branch
        %247 = sbr.rel (%p245) target = $region32
      $region31: #{pgnn_forward.2} parent=11 // pred_region
        _
      $region32: #{pgnn_forward.2} parent=11 // pred_fallthru
        _
      // Predicated region
      $region33: #{pgnn_forward.2} parent=11 // pred_check
        %p248 = pneg %p192
      $region34: #{pgnn_forward.2} parent=11 // pred_check_branch
        %250 = sbr.rel (%p248) target = $region36
      $region35: #{pgnn_forward.2} parent=11 // pred_region
        _
      $region36: #{pgnn_forward.2} parent=11 // pred_fallthru
        _
    $region12: #{pgnn_forward.2} parent=5 // pred_fallthru
      _
    %p251 = scmp.lt.s32.totalorder %s14, 2
    // Predicated region
    $region37: #{pgnn_forward.2} parent=5 // pred_check
      %p252 = pneg %p251
    $region38: #{pgnn_forward.2} parent=5 // pred_check_branch
      %254 = sbr.rel (%p252) target = $region40
    $region39: #{pgnn_forward.2} parent=5 // pred_region
      // Predicated region
      $region41: #{pgnn_forward.2} parent=39 // pred_check
        %p255 = pneg %p34
      $region42: #{pgnn_forward.2} parent=39 // pred_check_branch
        %257 = sbr.rel (%p255) target = $region44
      $region43: #{pgnn_forward.2} parent=39 // pred_region
        %s258 = smul.u32 16, %s14
        %p259 = scmp.lt.s32.totalorder %s258, 31
        %s260 = scalar_select %p259, %s258, 31
        %s261 = smul.addr %s260, 2
        %s262 = smul.addr %s261, 8
        %s263 = scalar_lea.vmem %s0, %s262
        %s264 = smul.u32 16, %s14
      $region44: #{pgnn_forward.2} parent=39 // pred_fallthru
        _
      // Predicated region
      $region45: #{pgnn_forward.2} parent=39 // pred_check
        %p265 = pneg %p60
      $region46: #{pgnn_forward.2} parent=39 // pred_check_branch
        %267 = sbr.rel (%p265) target = $region48
      $region47: #{pgnn_forward.2} parent=39 // pred_region
        %s268 = smul.u32 16, %s14
        %p269 = scmp.lt.s32.totalorder %s268, 31
        %s270 = scalar_select %p269, %s268, 31
        %s271 = smul.addr %s270, 8
        %s272 = scalar_lea.vmem %s1, %s271
        %s273 = smul.u32 16, %s14
      $region48: #{pgnn_forward.2} parent=39 // pred_fallthru
        _
    $region40: #{pgnn_forward.2} parent=5 // pred_fallthru
      _
    %p274 = scmp.le.s32.totalorder 1, %s14
    %p275 = scmp.lt.s32.totalorder %s14, 3
    %p276 = pnand %p274, %p275
    %p277 = pneg %p276
    // Predicated region
    $region49: #{pgnn_forward.2} parent=5 // pred_check
      _
    $region50: #{pgnn_forward.2} parent=5 // pred_check_branch
      %279 = sbr.rel (%p276) target = $region52
    $region51: #{pgnn_forward.2} parent=5 // pred_region
      %s280 = ssub.s32 %s14, 1
      %s281 = smul.u32 16, %s19
      %p282 = scmp.lt.s32.totalorder %s281, 31
      %s283 = scalar_select %p282, %s281, 31
      %s284 = smul.addr %s283, 2
      %s285 = smul.addr %s284, 8
      %s286 = scalar_lea.vmem %s0, %s285
      %p287 = pneg %p40
      %p288 = pneg %p37
      %s289 = smul.u32 16, %s19
      %p290 = scmp.lt.s32.totalorder %s289, 31
      %s291 = scalar_select %p290, %s289, 31
      %s292 = smul.addr %s291, 8
      %s293 = scalar_lea.vmem %s1, %s292
      %p294 = pneg %p66
      %p295 = pneg %p63
      %p296 = pneg %p87
      %p297 = pneg %p84
      %p298 = pneg %p108
      %p299 = pneg %p105
      %p300 = pneg %p129
      %p301 = pneg %p126
      %p302 = pneg %p150
      %p303 = pneg %p147
      %p304 = pneg %p171
      %p305 = pneg %p168
      %p306 = pneg %p192
      %p307 = pneg %p189
      %p308 = pneg %p218
      %p309 = pneg %p215
      %s310 = smul.u32 16, %s19
      %p311 = scmp.lt.s32.totalorder %s310, 31
      %s312 = scalar_select %p311, %s310, 31
      %s313 = smul.addr %s312, 8
      %s314 = scalar_lea.vmem %s8, %s313
      %s315 = smul.u32 16, %s19
      %p316 = scmp.lt.s32.totalorder %s315, 31
      %s317 = scalar_select %p316, %s315, 31
      %s318 = smul.addr %s317, 2
      %s319 = smul.addr %s318, 8
      %s320 = scalar_lea.vmem %s0, %s319
      %s321 = smul.u32 16, %s19
      %s322 = smul.u32 16, %s19
      %p323 = scmp.lt.s32.totalorder %s322, 31
      %s324 = scalar_select %p323, %s322, 31
      %s325 = smul.addr %s324, 8
      %s326 = scalar_lea.vmem %s1, %s325
      %s327 = smul.u32 16, %s19
      %s328 = smul.u32 16, %s19
      %p329 = scmp.lt.s32.totalorder %s328, 31
      %s330 = scalar_select %p329, %s328, 31
      %s331 = smul.addr %s330, 8
      %s332 = scalar_lea.vmem %s8, %s331
      %s333 = smul.u32 16, %s19
      %v334 = vld [vmem:[%s326] sm:$0xff]
      %v335 = vld [vmem:[%s326 + $0x8] sm:$0xff]
      %v336 = vld [vmem:[%s326 + $0x10] sm:$0xff]
      %v337 = vld [vmem:[%s326 + $0x18] sm:$0xff]
      %v338 = vld [vmem:[%s326 + $0x20] sm:$0xff]
      %v339 = vld [vmem:[%s326 + $0x28] sm:$0xff]
      %v340 = vld [vmem:[%s326 + $0x30] sm:$0xff]
      %v341 = vld [vmem:[%s326 + $0x38] sm:$0xff]
      %v342 = vld [vmem:[%s326 + $0x40] sm:$0xff]
      %v343 = vld [vmem:[%s326 + $0x48] sm:$0xff]
      %v344 = vld [vmem:[%s326 + $0x50] sm:$0xff]
      %v345 = vld [vmem:[%s326 + $0x58] sm:$0xff]
      %v346 = vld [vmem:[%s326 + $0x60] sm:$0xff]
      %v347 = vld [vmem:[%s326 + $0x68] sm:$0xff]
      %v348 = vld [vmem:[%s326 + $0x70] sm:$0xff]
      %v349 = vld [vmem:[%s326 + $0x78] sm:$0xff]
      %v350 = vld [vmem:[%s320] sm:$0xff]
      %v351 = vld [vmem:[%s320 + $0x8] sm:$0xff]
      %v352 = vld [vmem:[%s320 + $0x10] sm:$0xff]
      %v353 = vld [vmem:[%s320 + $0x18] sm:$0xff]
      %v354 = vld [vmem:[%s320 + $0x20] sm:$0xff]
      %v355 = vld [vmem:[%s320 + $0x28] sm:$0xff]
      %v356 = vld [vmem:[%s320 + $0x30] sm:$0xff]
      %v357 = vld [vmem:[%s320 + $0x38] sm:$0xff]
      %v358 = vld [vmem:[%s320 + $0x40] sm:$0xff]
      %v359 = vld [vmem:[%s320 + $0x48] sm:$0xff]
      %v360 = vld [vmem:[%s320 + $0x50] sm:$0xff]
      %v361 = vld [vmem:[%s320 + $0x58] sm:$0xff]
      %v362 = vld [vmem:[%s320 + $0x60] sm:$0xff]
      %v363 = vld [vmem:[%s320 + $0x68] sm:$0xff]
      %v364 = vld [vmem:[%s320 + $0x70] sm:$0xff]
      %v365 = vld [vmem:[%s320 + $0x78] sm:$0xff]
      %v366 = vld [vmem:[%s320 + $0x80] sm:$0xff]
      %v367 = vld [vmem:[%s320 + $0x88] sm:$0xff]
      %v368 = vld [vmem:[%s320 + $0x90] sm:$0xff]
      %v369 = vld [vmem:[%s320 + $0x98] sm:$0xff]
      %v370 = vld [vmem:[%s320 + $0xa0] sm:$0xff]
      %v371 = vld [vmem:[%s320 + $0xa8] sm:$0xff]
      %v372 = vld [vmem:[%s320 + $0xb0] sm:$0xff]
      %v373 = vld [vmem:[%s320 + $0xb8] sm:$0xff]
      %v374 = vld [vmem:[%s320 + $0xc0] sm:$0xff]
      %v375 = vld [vmem:[%s320 + $0xc8] sm:$0xff]
      %v376 = vld [vmem:[%s320 + $0xd0] sm:$0xff]
      %v377 = vld [vmem:[%s320 + $0xd8] sm:$0xff]
      %v378 = vld [vmem:[%s320 + $0xe0] sm:$0xff]
      %v379 = vld [vmem:[%s320 + $0xe8] sm:$0xff]
      %v380 = vld [vmem:[%s320 + $0xf0] sm:$0xff]
      %v381 = vld [vmem:[%s320 + $0xf8] sm:$0xff]
      %v382 = vld [vmem:[%s2] sm:$0xff]
      %v383 = vld [vmem:[%s2 + $0x8] sm:$0xff]
      %v384 = vld [vmem:[%s2 + $0x10] sm:$0xff]
      %v385 = vld [vmem:[%s2 + $0x18] sm:$0xff]
      %v386 = vld [vmem:[%s2 + $0x20] sm:$0xff]
      %v387 = vld [vmem:[%s2 + $0x28] sm:$0xff]
      %v388 = vld [vmem:[%s2 + $0x30] sm:$0xff]
      %v389 = vld [vmem:[%s2 + $0x38] sm:$0xff]
      %v390 = vld [vmem:[%s2 + $0x40] sm:$0xff]
      %v391 = vld [vmem:[%s2 + $0x48] sm:$0xff]
      %v392 = vld [vmem:[%s2 + $0x50] sm:$0xff]
      %v393 = vld [vmem:[%s2 + $0x58] sm:$0xff]
      %v394 = vld [vmem:[%s2 + $0x60] sm:$0xff]
      %v395 = vld [vmem:[%s2 + $0x68] sm:$0xff]
      %v396 = vld [vmem:[%s2 + $0x70] sm:$0xff]
      %v397 = vld [vmem:[%s2 + $0x78] sm:$0xff]
      %v398 = vld [vmem:[%s2 + $0x80] sm:$0xff]
      %v399 = vld [vmem:[%s2 + $0x88] sm:$0xff]
      %v400 = vld [vmem:[%s2 + $0x90] sm:$0xff]
      %v401 = vld [vmem:[%s2 + $0x98] sm:$0xff]
      %v402 = vld [vmem:[%s2 + $0xa0] sm:$0xff]
      %v403 = vld [vmem:[%s2 + $0xa8] sm:$0xff]
      %v404 = vld [vmem:[%s2 + $0xb0] sm:$0xff]
      %v405 = vld [vmem:[%s2 + $0xb8] sm:$0xff]
      %v406 = vld [vmem:[%s2 + $0xc0] sm:$0xff]
      %v407 = vld [vmem:[%s2 + $0xc8] sm:$0xff]
      %v408 = vld [vmem:[%s2 + $0xd0] sm:$0xff]
      %v409 = vld [vmem:[%s2 + $0xd8] sm:$0xff]
      %v410 = vld [vmem:[%s2 + $0xe0] sm:$0xff]
      %v411 = vld [vmem:[%s2 + $0xe8] sm:$0xff]
      %v412 = vld [vmem:[%s2 + $0xf0] sm:$0xff]
      %v413 = vld [vmem:[%s2 + $0xf8] sm:$0xff]
      %414 = vmatprep.subr.mxu0 %v383
      %415 = vmatpush1.msra.mxu0 %v382
      %416 = vmatprep.subr.mxu0 %v385
      %417 = vmatpush1.msra.mxu0 %v384
      %418 = vmatprep.subr.mxu0 %v387
      %419 = vmatpush1.msra.mxu0 %v386
      %420 = vmatprep.subr.mxu0 %v389
      %421 = vmatpush1.msra.mxu0 %v388
      %422 = vmatprep.subr.mxu0 %v391
      %423 = vmatpush1.msra.mxu0 %v390
      %424 = vmatprep.subr.mxu0 %v393
      %425 = vmatpush1.msra.mxu0 %v392
      %426 = vmatprep.subr.mxu0 %v395
      %427 = vmatpush1.msra.mxu0 %v394
      %428 = vmatprep.subr.mxu0 %v397
      %429 = vmatpush1.msra.mxu0 %v396
      %430 = vmatprep.subr.mxu0 %v399
      %431 = vmatpush1.msra.mxu0 %v398
      %432 = vmatprep.subr.mxu0 %v401
      %433 = vmatpush1.msra.mxu0 %v400
      %434 = vmatprep.subr.mxu0 %v403
      %435 = vmatpush1.msra.mxu0 %v402
      %436 = vmatprep.subr.mxu0 %v405
      %437 = vmatpush1.msra.mxu0 %v404
      %438 = vmatprep.subr.mxu0 %v407
      %439 = vmatpush1.msra.mxu0 %v406
      %440 = vmatprep.subr.mxu0 %v409
      %441 = vmatpush1.msra.mxu0 %v408
      %442 = vmatprep.subr.mxu0 %v411
      %443 = vmatpush1.msra.mxu0 %v410
      %444 = vmatprep.subr.mxu0 %v413
      %445 = vmatpush1.msra.mxu0 %v412
      %446 = vmatprep.subr.mxu0 0.0
      %447 = vmatpush1.msra.mxu0 0.0
      %448 = vmatprep.subr.mxu0 0.0
      %449 = vmatpush1.msra.mxu0 0.0
      %450 = vmatprep.subr.mxu0 0.0
      %451 = vmatpush1.msra.mxu0 0.0
      %452 = vmatprep.subr.mxu0 0.0
      %453 = vmatpush1.msra.mxu0 0.0
      %454 = vmatprep.subr.mxu0 0.0
      %455 = vmatpush1.msra.mxu0 0.0
      %456 = vmatprep.subr.mxu0 0.0
      %457 = vmatpush1.msra.mxu0 0.0
      %458 = vmatprep.subr.mxu0 0.0
      %459 = vmatpush1.msra.mxu0 0.0
      %460 = vmatprep.subr.mxu0 0.0
      %461 = vmatpush1.msra.mxu0 0.0
      %462 = vmatprep.subr.mxu0 0.0
      %463 = vmatpush1.msra.mxu0 0.0
      %464 = vmatprep.subr.mxu0 0.0
      %465 = vmatpush1.msra.mxu0 0.0
      %466 = vmatprep.subr.mxu0 0.0
      %467 = vmatpush1.msra.mxu0 0.0
      %468 = vmatprep.subr.mxu0 0.0
      %469 = vmatpush1.msra.mxu0 0.0
      %470 = vmatprep.subr.mxu0 0.0
      %471 = vmatpush1.msra.mxu0 0.0
      %472 = vmatprep.subr.mxu0 0.0
      %473 = vmatpush1.msra.mxu0 0.0
      %474 = vmatprep.subr.mxu0 0.0
      %475 = vmatpush1.msra.mxu0 0.0
      %476 = vmatprep.subr.mxu0 0.0
      %477 = vmatpush1.msra.mxu0 0.0
      %478 = vmatprep.mubr.f32.mxu0 0.0
      %479 = vmatmul.mubr.f32.gmra.mrb[0].mxu0 %v334
      %v480 = vpop.f32.mrb[0].mxu0
      %v481 = vadd.f32 0.0, %v480
      %v482 = vpop.f32.mrb[0].mxu0
      %v483 = vadd.f32 0.0, %v482
      %484 = vmatprep.mubr.f32.mxu0 0.0
      %485 = vmatmul.mubr.f32.gmra.mrb[0].mxu0 %v335
      %v486 = vpop.f32.mrb[0].mxu0
      %v487 = vadd.f32 0.0, %v486
      %v488 = vpop.f32.mrb[0].mxu0
      %v489 = vadd.f32 0.0, %v488
      %490 = vmatprep.mubr.f32.mxu0 0.0
      %491 = vmatmul.mubr.f32.gmra.mrb[0].mxu0 %v336
      %v492 = vpop.f32.mrb[0].mxu0
      %v493 = vadd.f32 0.0, %v492
      %v494 = vpop.f32.mrb[0].mxu0
      %v495 = vadd.f32 0.0, %v494
      %496 = vmatprep.mubr.f32.mxu0 0.0
      %497 = vmatmul.mubr.f32.gmra.mrb[0].mxu0 %v337
      %v498 = vpop.f32.mrb[0].mxu0
      %v499 = vadd.f32 0.0, %v498
      %v500 = vpop.f32.mrb[0].mxu0
      %v501 = vadd.f32 0.0, %v500
      %502 = vmatprep.mubr.f32.mxu0 0.0
      %503 = vmatmul.mubr.f32.gmra.mrb[0].mxu0 %v338
      %v504 = vpop.f32.mrb[0].mxu0
      %v505 = vadd.f32 0.0, %v504
      %v506 = vpop.f32.mrb[0].mxu0
      %v507 = vadd.f32 0.0, %v506
      %508 = vmatprep.mubr.f32.mxu0 0.0
      %509 = vmatmul.mubr.f32.gmra.mrb[0].mxu0 %v339
      %v510 = vpop.f32.mrb[0].mxu0
      %v511 = vadd.f32 0.0, %v510
      %v512 = vpop.f32.mrb[0].mxu0
      %v513 = vadd.f32 0.0, %v512
      %514 = vmatprep.mubr.f32.mxu0 0.0
      %515 = vmatmul.mubr.f32.gmra.mrb[0].mxu0 %v340
      %v516 = vpop.f32.mrb[0].mxu0
      %v517 = vadd.f32 0.0, %v516
      %v518 = vpop.f32.mrb[0].mxu0
      %v519 = vadd.f32 0.0, %v518
      %520 = vmatprep.mubr.f32.mxu0 0.0
      %521 = vmatmul.mubr.f32.gmra.mrb[0].mxu0 %v341
      %v522 = vpop.f32.mrb[0].mxu0
      %v523 = vadd.f32 0.0, %v522
      %v524 = vpop.f32.mrb[0].mxu0
      %v525 = vadd.f32 0.0, %v524
      %526 = vmatprep.mubr.f32.mxu0 0.0
      %527 = vmatmul.mubr.f32.gmra.mrb[0].mxu0 %v342
      %v528 = vpop.f32.mrb[0].mxu0
      %v529 = vadd.f32 0.0, %v528
      %v530 = vpop.f32.mrb[0].mxu0
      %v531 = vadd.f32 0.0, %v530
      %532 = vmatprep.mubr.f32.mxu0 0.0
      %533 = vmatmul.mubr.f32.gmra.mrb[0].mxu0 %v343
      %v534 = vpop.f32.mrb[0].mxu0
      %v535 = vadd.f32 0.0, %v534
      %v536 = vpop.f32.mrb[0].mxu0
      %v537 = vadd.f32 0.0, %v536
      %538 = vmatprep.mubr.f32.mxu0 0.0
      %539 = vmatmul.mubr.f32.gmra.mrb[0].mxu0 %v344
      %v540 = vpop.f32.mrb[0].mxu0
      %v541 = vadd.f32 0.0, %v540
      %v542 = vpop.f32.mrb[0].mxu0
      %v543 = vadd.f32 0.0, %v542
      %544 = vmatprep.mubr.f32.mxu0 0.0
      %545 = vmatmul.mubr.f32.gmra.mrb[0].mxu0 %v345
      %v546 = vpop.f32.mrb[0].mxu0
      %v547 = vadd.f32 0.0, %v546
      %v548 = vpop.f32.mrb[0].mxu0
      %v549 = vadd.f32 0.0, %v548
      %550 = vmatprep.mubr.f32.mxu0 0.0
      %551 = vmatmul.mubr.f32.gmra.mrb[0].mxu0 %v346
      %v552 = vpop.f32.mrb[0].mxu0
      %v553 = vadd.f32 0.0, %v552
      %v554 = vpop.f32.mrb[0].mxu0
      %v555 = vadd.f32 0.0, %v554
      %556 = vmatprep.mubr.f32.mxu0 0.0
      %557 = vmatmul.mubr.f32.gmra.mrb[0].mxu0 %v347
      %v558 = vpop.f32.mrb[0].mxu0
      %v559 = vadd.f32 0.0, %v558
      %v560 = vpop.f32.mrb[0].mxu0
      %v561 = vadd.f32 0.0, %v560
      %562 = vmatprep.mubr.f32.mxu0 0.0
      %563 = vmatmul.mubr.f32.gmra.mrb[0].mxu0 %v348
      %v564 = vpop.f32.mrb[0].mxu0
      %v565 = vadd.f32 0.0, %v564
      %v566 = vpop.f32.mrb[0].mxu0
      %v567 = vadd.f32 0.0, %v566
      %568 = vmatprep.mubr.f32.mxu0 0.0
      %569 = vmatmul.mubr.f32.gmra.mrb[0].mxu0 %v349
      %v570 = vpop.f32.mrb[0].mxu0
      %v571 = vadd.f32 0.0, %v570
      %v572 = vpop.f32.mrb[0].mxu0
      %v573 = vadd.f32 0.0, %v572
      %574 = vdwg.mxu0
      %v575 = vld [vmem:[%s5] ss:$4 sm:$0x3]
      %v577 = vlaneseq
      %v578 = vshrl.u32 %v577, 7
      %v579 = vsub.s32 0, %v578
      %v580 = vrot.slane %v575, %v579
      %v581 = vlaneseq
      %v582 = vshrl.u32 %v581, 7
      %v583 = vsub.s32 1, %v582
      %v584 = vrot.slane %v575, %v583
      %v587 = vmul.f32 %v481, %v580
      %v588 = vmul.f32 %v483, %v584
      %v589 = vmul.f32 %v487, %v580
      %v590 = vmul.f32 %v489, %v584
      %v591 = vmul.f32 %v493, %v580
      %v592 = vmul.f32 %v495, %v584
      %v593 = vmul.f32 %v499, %v580
      %v594 = vmul.f32 %v501, %v584
      %v595 = vmul.f32 %v505, %v580
      %v596 = vmul.f32 %v507, %v584
      %v597 = vmul.f32 %v511, %v580
      %v598 = vmul.f32 %v513, %v584
      %v599 = vmul.f32 %v517, %v580
      %v600 = vmul.f32 %v519, %v584
      %v601 = vmul.f32 %v523, %v580
      %v602 = vmul.f32 %v525, %v584
      %v603 = vmul.f32 %v529, %v580
      %v604 = vmul.f32 %v531, %v584
      %v605 = vmul.f32 %v535, %v580
      %v606 = vmul.f32 %v537, %v584
      %v607 = vmul.f32 %v541, %v580
      %v608 = vmul.f32 %v543, %v584
      %v609 = vmul.f32 %v547, %v580
      %v610 = vmul.f32 %v549, %v584
      %v611 = vmul.f32 %v553, %v580
      %v612 = vmul.f32 %v555, %v584
      %v613 = vmul.f32 %v559, %v580
      %v614 = vmul.f32 %v561, %v584
      %v615 = vmul.f32 %v565, %v580
      %v616 = vmul.f32 %v567, %v584
      %v617 = vmul.f32 %v571, %v580
      %v618 = vmul.f32 %v573, %v584
      %s619 = scalar_lea.vmem %s5, 1
      %v620 = vld [vmem:[%s619] ss:$4 sm:$0x3]
      %v622 = vlaneseq
      %v623 = vshrl.u32 %v622, 7
      %v624 = vsub.s32 0, %v623
      %v625 = vrot.slane %v620, %v624
      %v626 = vlaneseq
      %v627 = vshrl.u32 %v626, 7
      %v628 = vsub.s32 1, %v627
      %v629 = vrot.slane %v620, %v628
      %v632 = vadd.f32 %v587, %v625
      %v633 = vadd.f32 %v588, %v629
      %v634 = vadd.f32 %v589, %v625
      %v635 = vadd.f32 %v590, %v629
      %v636 = vadd.f32 %v591, %v625
      %v637 = vadd.f32 %v592, %v629
      %v638 = vadd.f32 %v593, %v625
      %v639 = vadd.f32 %v594, %v629
      %v640 = vadd.f32 %v595, %v625
      %v641 = vadd.f32 %v596, %v629
      %v642 = vadd.f32 %v597, %v625
      %v643 = vadd.f32 %v598, %v629
      %v644 = vadd.f32 %v599, %v625
      %v645 = vadd.f32 %v600, %v629
      %v646 = vadd.f32 %v601, %v625
      %v647 = vadd.f32 %v602, %v629
      %v648 = vadd.f32 %v603, %v625
      %v649 = vadd.f32 %v604, %v629
      %v650 = vadd.f32 %v605, %v625
      %v651 = vadd.f32 %v606, %v629
      %v652 = vadd.f32 %v607, %v625
      %v653 = vadd.f32 %v608, %v629
      %v654 = vadd.f32 %v609, %v625
      %v655 = vadd.f32 %v610, %v629
      %v656 = vadd.f32 %v611, %v625
      %v657 = vadd.f32 %v612, %v629
      %v658 = vadd.f32 %v613, %v625
      %v659 = vadd.f32 %v614, %v629
      %v660 = vadd.f32 %v615, %v625
      %v661 = vadd.f32 %v616, %v629
      %v662 = vadd.f32 %v617, %v625
      %v663 = vadd.f32 %v618, %v629
      %v664 = vmax.f32 %v632, 0.0
      %v665 = vmax.f32 %v633, 0.0
      %v666 = vmax.f32 %v634, 0.0
      %v667 = vmax.f32 %v635, 0.0
      %v668 = vmax.f32 %v636, 0.0
      %v669 = vmax.f32 %v637, 0.0
      %v670 = vmax.f32 %v638, 0.0
      %v671 = vmax.f32 %v639, 0.0
      %v672 = vmax.f32 %v640, 0.0
      %v673 = vmax.f32 %v641, 0.0
      %v674 = vmax.f32 %v642, 0.0
      %v675 = vmax.f32 %v643, 0.0
      %v676 = vmax.f32 %v644, 0.0
      %v677 = vmax.f32 %v645, 0.0
      %v678 = vmax.f32 %v646, 0.0
      %v679 = vmax.f32 %v647, 0.0
      %v680 = vmax.f32 %v648, 0.0
      %v681 = vmax.f32 %v649, 0.0
      %v682 = vmax.f32 %v650, 0.0
      %v683 = vmax.f32 %v651, 0.0
      %v684 = vmax.f32 %v652, 0.0
      %v685 = vmax.f32 %v653, 0.0
      %v686 = vmax.f32 %v654, 0.0
      %v687 = vmax.f32 %v655, 0.0
      %v688 = vmax.f32 %v656, 0.0
      %v689 = vmax.f32 %v657, 0.0
      %v690 = vmax.f32 %v658, 0.0
      %v691 = vmax.f32 %v659, 0.0
      %v692 = vmax.f32 %v660, 0.0
      %v693 = vmax.f32 %v661, 0.0
      %v694 = vmax.f32 %v662, 0.0
      %v695 = vmax.f32 %v663, 0.0
      %v696 = vld [vmem:[%s3] sm:$0xff]
      %v697 = vld [vmem:[%s3 + $0x8] sm:$0xff]
      %v698 = vld [vmem:[%s3 + $0x10] sm:$0xff]
      %v699 = vld [vmem:[%s3 + $0x18] sm:$0xff]
      %v700 = vld [vmem:[%s3 + $0x20] sm:$0xff]
      %v701 = vld [vmem:[%s3 + $0x28] sm:$0xff]
      %v702 = vld [vmem:[%s3 + $0x30] sm:$0xff]
      %v703 = vld [vmem:[%s3 + $0x38] sm:$0xff]
      %v704 = vld [vmem:[%s3 + $0x40] sm:$0xff]
      %v705 = vld [vmem:[%s3 + $0x48] sm:$0xff]
      %v706 = vld [vmem:[%s3 + $0x50] sm:$0xff]
      %v707 = vld [vmem:[%s3 + $0x58] sm:$0xff]
      %v708 = vld [vmem:[%s3 + $0x60] sm:$0xff]
      %v709 = vld [vmem:[%s3 + $0x68] sm:$0xff]
      %v710 = vld [vmem:[%s3 + $0x70] sm:$0xff]
      %v711 = vld [vmem:[%s3 + $0x78] sm:$0xff]
      %v712 = vld [vmem:[%s3 + $0x80] sm:$0xff]
      %v713 = vld [vmem:[%s3 + $0x88] sm:$0xff]
      %v714 = vld [vmem:[%s3 + $0x90] sm:$0xff]
      %v715 = vld [vmem:[%s3 + $0x98] sm:$0xff]
      %v716 = vld [vmem:[%s3 + $0xa0] sm:$0xff]
      %v717 = vld [vmem:[%s3 + $0xa8] sm:$0xff]
      %v718 = vld [vmem:[%s3 + $0xb0] sm:$0xff]
      %v719 = vld [vmem:[%s3 + $0xb8] sm:$0xff]
      %v720 = vld [vmem:[%s3 + $0xc0] sm:$0xff]
      %v721 = vld [vmem:[%s3 + $0xc8] sm:$0xff]
      %v722 = vld [vmem:[%s3 + $0xd0] sm:$0xff]
      %v723 = vld [vmem:[%s3 + $0xd8] sm:$0xff]
      %v724 = vld [vmem:[%s3 + $0xe0] sm:$0xff]
      %v725 = vld [vmem:[%s3 + $0xe8] sm:$0xff]
      %v726 = vld [vmem:[%s3 + $0xf0] sm:$0xff]
      %v727 = vld [vmem:[%s3 + $0xf8] sm:$0xff]
      %v728 = vld [vmem:[%s3 + $0x100] sm:$0xff]
      %v729 = vld [vmem:[%s3 + $0x108] sm:$0xff]
      %v730 = vld [vmem:[%s3 + $0x110] sm:$0xff]
      %v731 = vld [vmem:[%s3 + $0x118] sm:$0xff]
      %v732 = vld [vmem:[%s3 + $0x120] sm:$0xff]
      %v733 = vld [vmem:[%s3 + $0x128] sm:$0xff]
      %v734 = vld [vmem:[%s3 + $0x130] sm:$0xff]
      %v735 = vld [vmem:[%s3 + $0x138] sm:$0xff]
      %v736 = vld [vmem:[%s3 + $0x140] sm:$0xff]
      %v737 = vld [vmem:[%s3 + $0x148] sm:$0xff]
      %v738 = vld [vmem:[%s3 + $0x150] sm:$0xff]
      %v739 = vld [vmem:[%s3 + $0x158] sm:$0xff]
      %v740 = vld [vmem:[%s3 + $0x160] sm:$0xff]
      %v741 = vld [vmem:[%s3 + $0x168] sm:$0xff]
      %v742 = vld [vmem:[%s3 + $0x170] sm:$0xff]
      %v743 = vld [vmem:[%s3 + $0x178] sm:$0xff]
      %v744 = vld [vmem:[%s3 + $0x180] sm:$0xff]
      %v745 = vld [vmem:[%s3 + $0x188] sm:$0xff]
      %v746 = vld [vmem:[%s3 + $0x190] sm:$0xff]
      %v747 = vld [vmem:[%s3 + $0x198] sm:$0xff]
      %v748 = vld [vmem:[%s3 + $0x1a0] sm:$0xff]
      %v749 = vld [vmem:[%s3 + $0x1a8] sm:$0xff]
      %v750 = vld [vmem:[%s3 + $0x1b0] sm:$0xff]
      %v751 = vld [vmem:[%s3 + $0x1b8] sm:$0xff]
      %v752 = vld [vmem:[%s3 + $0x1c0] sm:$0xff]
      %v753 = vld [vmem:[%s3 + $0x1c8] sm:$0xff]
      %v754 = vld [vmem:[%s3 + $0x1d0] sm:$0xff]
      %v755 = vld [vmem:[%s3 + $0x1d8] sm:$0xff]
      %v756 = vld [vmem:[%s3 + $0x1e0] sm:$0xff]
      %v757 = vld [vmem:[%s3 + $0x1e8] sm:$0xff]
      %v758 = vld [vmem:[%s3 + $0x1f0] sm:$0xff]
      %v759 = vld [vmem:[%s3 + $0x1f8] sm:$0xff]
      %s760 = scalar_lea.vmem %s5, 2
      %v761 = vld [vmem:[%s760] ss:$4 sm:$0x3]
      %v763 = vlaneseq
      %v764 = vshrl.u32 %v763, 7
      %v765 = vsub.s32 0, %v764
      %v766 = vrot.slane %v761, %v765
      %v767 = vlaneseq
      %v768 = vshrl.u32 %v767, 7
      %v769 = vsub.s32 1, %v768
      %v770 = vrot.slane %v761, %v769
      %773 = vmatprep.subr.mxu0 %v697
      %774 = vmatpush1.msra.mxu0 %v696
      %775 = vmatprep.subr.mxu0 %v699
      %776 = vmatpush1.msra.mxu0 %v698
      %777 = vmatprep.subr.mxu0 %v701
      %778 = vmatpush1.msra.mxu0 %v700
      %779 = vmatprep.subr.mxu0 %v703
      %780 = vmatpush1.msra.mxu0 %v702
      %781 = vmatprep.subr.mxu0 %v705
      %782 = vmatpush1.msra.mxu0 %v704
      %783 = vmatprep.subr.mxu0 %v707
      %784 = vmatpush1.msra.mxu0 %v706
      %785 = vmatprep.subr.mxu0 %v709
      %786 = vmatpush1.msra.mxu0 %v708
      %787 = vmatprep.subr.mxu0 %v711
      %788 = vmatpush1.msra.mxu0 %v710
      %789 = vmatprep.subr.mxu0 %v713
      %790 = vmatpush1.msra.mxu0 %v712
      %791 = vmatprep.subr.mxu0 %v715
      %792 = vmatpush1.msra.mxu0 %v714
      %793 = vmatprep.subr.mxu0 %v717
      %794 = vmatpush1.msra.mxu0 %v716
      %795 = vmatprep.subr.mxu0 %v719
      %796 = vmatpush1.msra.mxu0 %v718
      %797 = vmatprep.subr.mxu0 %v721
      %798 = vmatpush1.msra.mxu0 %v720
      %799 = vmatprep.subr.mxu0 %v723
      %800 = vmatpush1.msra.mxu0 %v722
      %801 = vmatprep.subr.mxu0 %v725
      %802 = vmatpush1.msra.mxu0 %v724
      %803 = vmatprep.subr.mxu0 %v727
      %804 = vmatpush1.msra.mxu0 %v726
      %805 = vmatprep.subr.mxu0 %v729
      %806 = vmatpush1.msra.mxu0 %v728
      %807 = vmatprep.subr.mxu0 %v731
      %808 = vmatpush1.msra.mxu0 %v730
      %809 = vmatprep.subr.mxu0 %v733
      %810 = vmatpush1.msra.mxu0 %v732
      %811 = vmatprep.subr.mxu0 %v735
      %812 = vmatpush1.msra.mxu0 %v734
      %813 = vmatprep.subr.mxu0 %v737
      %814 = vmatpush1.msra.mxu0 %v736
      %815 = vmatprep.subr.mxu0 %v739
      %816 = vmatpush1.msra.mxu0 %v738
      %817 = vmatprep.subr.mxu0 %v741
      %818 = vmatpush1.msra.mxu0 %v740
      %819 = vmatprep.subr.mxu0 %v743
      %820 = vmatpush1.msra.mxu0 %v742
      %821 = vmatprep.subr.mxu0 %v745
      %822 = vmatpush1.msra.mxu0 %v744
      %823 = vmatprep.subr.mxu0 %v747
      %824 = vmatpush1.msra.mxu0 %v746
      %825 = vmatprep.subr.mxu0 %v749
      %826 = vmatpush1.msra.mxu0 %v748
      %827 = vmatprep.subr.mxu0 %v751
      %828 = vmatpush1.msra.mxu0 %v750
      %829 = vmatprep.subr.mxu0 %v753
      %830 = vmatpush1.msra.mxu0 %v752
      %831 = vmatprep.subr.mxu0 %v755
      %832 = vmatpush1.msra.mxu0 %v754
      %833 = vmatprep.subr.mxu0 %v757
      %834 = vmatpush1.msra.mxu0 %v756
      %835 = vmatprep.subr.mxu0 %v759
      %836 = vmatpush1.msra.mxu0 %v758
      %837 = vmatprep.mubr.f32.mxu0 %v665
      %838 = vmatmul.mubr.f32.gmra.mrb[0].mxu0 %v664
      %v839 = vpop.f32.mrb[0].mxu0
      %v840 = vadd.f32 %v766, %v839
      %v841 = vpop.f32.mrb[0].mxu0
      %v842 = vadd.f32 %v770, %v841
      %843 = vmatprep.mubr.f32.mxu0 %v667
      %844 = vmatmul.mubr.f32.gmra.mrb[0].mxu0 %v666
      %v845 = vpop.f32.mrb[0].mxu0
      %v846 = vadd.f32 %v766, %v845
      %v847 = vpop.f32.mrb[0].mxu0
      %v848 = vadd.f32 %v770, %v847
      %849 = vmatprep.mubr.f32.mxu0 %v669
      %850 = vmatmul.mubr.f32.gmra.mrb[0].mxu0 %v668
      %v851 = vpop.f32.mrb[0].mxu0
      %v852 = vadd.f32 %v766, %v851
      %v853 = vpop.f32.mrb[0].mxu0
      %v854 = vadd.f32 %v770, %v853
      %855 = vmatprep.mubr.f32.mxu0 %v671
      %856 = vmatmul.mubr.f32.gmra.mrb[0].mxu0 %v670
      %v857 = vpop.f32.mrb[0].mxu0
      %v858 = vadd.f32 %v766, %v857
      %v859 = vpop.f32.mrb[0].mxu0
      %v860 = vadd.f32 %v770, %v859
      %861 = vmatprep.mubr.f32.mxu0 %v673
      %862 = vmatmul.mubr.f32.gmra.mrb[0].mxu0 %v672
      %v863 = vpop.f32.mrb[0].mxu0
      %v864 = vadd.f32 %v766, %v863
      %v865 = vpop.f32.mrb[0].mxu0
      %v866 = vadd.f32 %v770, %v865
      %867 = vmatprep.mubr.f32.mxu0 %v675
      %868 = vmatmul.mubr.f32.gmra.mrb[0].mxu0 %v674
      %v869 = vpop.f32.mrb[0].mxu0
      %v870 = vadd.f32 %v766, %v869
      %v871 = vpop.f32.mrb[0].mxu0
      %v872 = vadd.f32 %v770, %v871
      %873 = vmatprep.mubr.f32.mxu0 %v677
      %874 = vmatmul.mubr.f32.gmra.mrb[0].mxu0 %v676
      %v875 = vpop.f32.mrb[0].mxu0
      %v876 = vadd.f32 %v766, %v875
      %v877 = vpop.f32.mrb[0].mxu0
      %v878 = vadd.f32 %v770, %v877
      %879 = vmatprep.mubr.f32.mxu0 %v679
      %880 = vmatmul.mubr.f32.gmra.mrb[0].mxu0 %v678
      %v881 = vpop.f32.mrb[0].mxu0
      %v882 = vadd.f32 %v766, %v881
      %v883 = vpop.f32.mrb[0].mxu0
      %v884 = vadd.f32 %v770, %v883
      %885 = vmatprep.mubr.f32.mxu0 %v681
      %886 = vmatmul.mubr.f32.gmra.mrb[0].mxu0 %v680
      %v887 = vpop.f32.mrb[0].mxu0
      %v888 = vadd.f32 %v766, %v887
      %v889 = vpop.f32.mrb[0].mxu0
      %v890 = vadd.f32 %v770, %v889
      %891 = vmatprep.mubr.f32.mxu0 %v683
      %892 = vmatmul.mubr.f32.gmra.mrb[0].mxu0 %v682
      %v893 = vpop.f32.mrb[0].mxu0
      %v894 = vadd.f32 %v766, %v893
      %v895 = vpop.f32.mrb[0].mxu0
      %v896 = vadd.f32 %v770, %v895
      %897 = vmatprep.mubr.f32.mxu0 %v685
      %898 = vmatmul.mubr.f32.gmra.mrb[0].mxu0 %v684
      %v899 = vpop.f32.mrb[0].mxu0
      %v900 = vadd.f32 %v766, %v899
      %v901 = vpop.f32.mrb[0].mxu0
      %v902 = vadd.f32 %v770, %v901
      %903 = vmatprep.mubr.f32.mxu0 %v687
      %904 = vmatmul.mubr.f32.gmra.mrb[0].mxu0 %v686
      %v905 = vpop.f32.mrb[0].mxu0
      %v906 = vadd.f32 %v766, %v905
      %v907 = vpop.f32.mrb[0].mxu0
      %v908 = vadd.f32 %v770, %v907
      %909 = vmatprep.mubr.f32.mxu0 %v689
      %910 = vmatmul.mubr.f32.gmra.mrb[0].mxu0 %v688
      %v911 = vpop.f32.mrb[0].mxu0
      %v912 = vadd.f32 %v766, %v911
      %v913 = vpop.f32.mrb[0].mxu0
      %v914 = vadd.f32 %v770, %v913
      %915 = vmatprep.mubr.f32.mxu0 %v691
      %916 = vmatmul.mubr.f32.gmra.mrb[0].mxu0 %v690
      %v917 = vpop.f32.mrb[0].mxu0
      %v918 = vadd.f32 %v766, %v917
      %v919 = vpop.f32.mrb[0].mxu0
      %v920 = vadd.f32 %v770, %v919
      %921 = vmatprep.mubr.f32.mxu0 %v693
      %922 = vmatmul.mubr.f32.gmra.mrb[0].mxu0 %v692
      %v923 = vpop.f32.mrb[0].mxu0
      %v924 = vadd.f32 %v766, %v923
      %v925 = vpop.f32.mrb[0].mxu0
      %v926 = vadd.f32 %v770, %v925
      %927 = vmatprep.mubr.f32.mxu0 %v695
      %928 = vmatmul.mubr.f32.gmra.mrb[0].mxu0 %v694
      %v929 = vpop.f32.mrb[0].mxu0
      %v930 = vadd.f32 %v766, %v929
      %v931 = vpop.f32.mrb[0].mxu0
      %v932 = vadd.f32 %v770, %v931
      %933 = vdwg.mxu0
      %v934 = vld [vmem:[%s4] sm:$0xff]
      %v935 = vld [vmem:[%s4 + $0x8] sm:$0xff]
      %v936 = vld [vmem:[%s4 + $0x10] sm:$0xff]
      %v937 = vld [vmem:[%s4 + $0x18] sm:$0xff]
      %v938 = vld [vmem:[%s4 + $0x20] sm:$0xff]
      %v939 = vld [vmem:[%s4 + $0x28] sm:$0xff]
      %v940 = vld [vmem:[%s4 + $0x30] sm:$0xff]
      %v941 = vld [vmem:[%s4 + $0x38] sm:$0xff]
      %v942 = vld [vmem:[%s4 + $0x40] sm:$0xff]
      %v943 = vld [vmem:[%s4 + $0x48] sm:$0xff]
      %v944 = vld [vmem:[%s4 + $0x50] sm:$0xff]
      %v945 = vld [vmem:[%s4 + $0x58] sm:$0xff]
      %v946 = vld [vmem:[%s4 + $0x60] sm:$0xff]
      %v947 = vld [vmem:[%s4 + $0x68] sm:$0xff]
      %v948 = vld [vmem:[%s4 + $0x70] sm:$0xff]
      %v949 = vld [vmem:[%s4 + $0x78] sm:$0xff]
      %v950 = vld [vmem:[%s4 + $0x80] sm:$0xff]
      %v951 = vld [vmem:[%s4 + $0x88] sm:$0xff]
      %v952 = vld [vmem:[%s4 + $0x90] sm:$0xff]
      %v953 = vld [vmem:[%s4 + $0x98] sm:$0xff]
      %v954 = vld [vmem:[%s4 + $0xa0] sm:$0xff]
      %v955 = vld [vmem:[%s4 + $0xa8] sm:$0xff]
      %v956 = vld [vmem:[%s4 + $0xb0] sm:$0xff]
      %v957 = vld [vmem:[%s4 + $0xb8] sm:$0xff]
      %v958 = vld [vmem:[%s4 + $0xc0] sm:$0xff]
      %v959 = vld [vmem:[%s4 + $0xc8] sm:$0xff]
      %v960 = vld [vmem:[%s4 + $0xd0] sm:$0xff]
      %v961 = vld [vmem:[%s4 + $0xd8] sm:$0xff]
      %v962 = vld [vmem:[%s4 + $0xe0] sm:$0xff]
      %v963 = vld [vmem:[%s4 + $0xe8] sm:$0xff]
      %v964 = vld [vmem:[%s4 + $0xf0] sm:$0xff]
      %v965 = vld [vmem:[%s4 + $0xf8] sm:$0xff]
      %966 = vmatprep.subr.mxu0 %v935
      %967 = vmatpush1.msra.mxu0 %v934
      %968 = vmatprep.subr.mxu0 %v937
      %969 = vmatpush1.msra.mxu0 %v936
      %970 = vmatprep.subr.mxu0 %v939
      %971 = vmatpush1.msra.mxu0 %v938
      %972 = vmatprep.subr.mxu0 %v941
      %973 = vmatpush1.msra.mxu0 %v940
      %974 = vmatprep.subr.mxu0 %v943
      %975 = vmatpush1.msra.mxu0 %v942
      %976 = vmatprep.subr.mxu0 %v945
      %977 = vmatpush1.msra.mxu0 %v944
      %978 = vmatprep.subr.mxu0 %v947
      %979 = vmatpush1.msra.mxu0 %v946
      %980 = vmatprep.subr.mxu0 %v949
      %981 = vmatpush1.msra.mxu0 %v948
      %982 = vmatprep.subr.mxu0 %v951
      %983 = vmatpush1.msra.mxu0 %v950
      %984 = vmatprep.subr.mxu0 %v953
      %985 = vmatpush1.msra.mxu0 %v952
      %986 = vmatprep.subr.mxu0 %v955
      %987 = vmatpush1.msra.mxu0 %v954
      %988 = vmatprep.subr.mxu0 %v957
      %989 = vmatpush1.msra.mxu0 %v956
      %990 = vmatprep.subr.mxu0 %v959
      %991 = vmatpush1.msra.mxu0 %v958
      %992 = vmatprep.subr.mxu0 %v961
      %993 = vmatpush1.msra.mxu0 %v960
      %994 = vmatprep.subr.mxu0 %v963
      %995 = vmatpush1.msra.mxu0 %v962
      %996 = vmatprep.subr.mxu0 %v965
      %997 = vmatpush1.msra.mxu0 %v964
      %998 = vmatprep.subr.mxu0 0.0
      %999 = vmatpush1.msra.mxu0 0.0
      %1000 = vmatprep.subr.mxu0 0.0
      %1001 = vmatpush1.msra.mxu0 0.0
      %1002 = vmatprep.subr.mxu0 0.0
      %1003 = vmatpush1.msra.mxu0 0.0
      %1004 = vmatprep.subr.mxu0 0.0
      %1005 = vmatpush1.msra.mxu0 0.0
      %1006 = vmatprep.subr.mxu0 0.0
      %1007 = vmatpush1.msra.mxu0 0.0
      %1008 = vmatprep.subr.mxu0 0.0
      %1009 = vmatpush1.msra.mxu0 0.0
      %1010 = vmatprep.subr.mxu0 0.0
      %1011 = vmatpush1.msra.mxu0 0.0
      %1012 = vmatprep.subr.mxu0 0.0
      %1013 = vmatpush1.msra.mxu0 0.0
      %1014 = vmatprep.subr.mxu0 0.0
      %1015 = vmatpush1.msra.mxu0 0.0
      %1016 = vmatprep.subr.mxu0 0.0
      %1017 = vmatpush1.msra.mxu0 0.0
      %1018 = vmatprep.subr.mxu0 0.0
      %1019 = vmatpush1.msra.mxu0 0.0
      %1020 = vmatprep.subr.mxu0 0.0
      %1021 = vmatpush1.msra.mxu0 0.0
      %1022 = vmatprep.subr.mxu0 0.0
      %1023 = vmatpush1.msra.mxu0 0.0
      %1024 = vmatprep.subr.mxu0 0.0
      %1025 = vmatpush1.msra.mxu0 0.0
      %1026 = vmatprep.subr.mxu0 0.0
      %1027 = vmatpush1.msra.mxu0 0.0
      %1028 = vmatprep.subr.mxu0 0.0
      %1029 = vmatpush1.msra.mxu0 0.0
      %1030 = vmatprep.mubr.f32.mxu0 0.0
      %1031 = vmatmul.mubr.f32.gmra.mrb[0].mxu0 %v334
      %v1032 = vpop.f32.mrb[0].mxu0
      %v1033 = vadd.f32 0.0, %v1032
      %v1034 = vpop.f32.mrb[0].mxu0
      %v1035 = vadd.f32 0.0, %v1034
      %1036 = vmatprep.mubr.f32.mxu0 0.0
      %1037 = vmatmul.mubr.f32.gmra.mrb[0].mxu0 %v335
      %v1038 = vpop.f32.mrb[0].mxu0
      %v1039 = vadd.f32 0.0, %v1038
      %v1040 = vpop.f32.mrb[0].mxu0
      %v1041 = vadd.f32 0.0, %v1040
      %1042 = vmatprep.mubr.f32.mxu0 0.0
      %1043 = vmatmul.mubr.f32.gmra.mrb[0].mxu0 %v336
      %v1044 = vpop.f32.mrb[0].mxu0
      %v1045 = vadd.f32 0.0, %v1044
      %v1046 = vpop.f32.mrb[0].mxu0
      %v1047 = vadd.f32 0.0, %v1046
      %1048 = vmatprep.mubr.f32.mxu0 0.0
      %1049 = vmatmul.mubr.f32.gmra.mrb[0].mxu0 %v337
      %v1050 = vpop.f32.mrb[0].mxu0
      %v1051 = vadd.f32 0.0, %v1050
      %v1052 = vpop.f32.mrb[0].mxu0
      %v1053 = vadd.f32 0.0, %v1052
      %1054 = vmatprep.mubr.f32.mxu0 0.0
      %1055 = vmatmul.mubr.f32.gmra.mrb[0].mxu0 %v338
      %v1056 = vpop.f32.mrb[0].mxu0
      %v1057 = vadd.f32 0.0, %v1056
      %v1058 = vpop.f32.mrb[0].mxu0
      %v1059 = vadd.f32 0.0, %v1058
      %1060 = vmatprep.mubr.f32.mxu0 0.0
      %1061 = vmatmul.mubr.f32.gmra.mrb[0].mxu0 %v339
      %v1062 = vpop.f32.mrb[0].mxu0
      %v1063 = vadd.f32 0.0, %v1062
      %v1064 = vpop.f32.mrb[0].mxu0
      %v1065 = vadd.f32 0.0, %v1064
      %1066 = vmatprep.mubr.f32.mxu0 0.0
      %1067 = vmatmul.mubr.f32.gmra.mrb[0].mxu0 %v340
      %v1068 = vpop.f32.mrb[0].mxu0
      %v1069 = vadd.f32 0.0, %v1068
      %v1070 = vpop.f32.mrb[0].mxu0
      %v1071 = vadd.f32 0.0, %v1070
      %1072 = vmatprep.mubr.f32.mxu0 0.0
      %1073 = vmatmul.mubr.f32.gmra.mrb[0].mxu0 %v341
      %v1074 = vpop.f32.mrb[0].mxu0
      %v1075 = vadd.f32 0.0, %v1074
      %v1076 = vpop.f32.mrb[0].mxu0
      %v1077 = vadd.f32 0.0, %v1076
      %1078 = vmatprep.mubr.f32.mxu0 0.0
      %1079 = vmatmul.mubr.f32.gmra.mrb[0].mxu0 %v342
      %v1080 = vpop.f32.mrb[0].mxu0
      %v1081 = vadd.f32 0.0, %v1080
      %v1082 = vpop.f32.mrb[0].mxu0
      %v1083 = vadd.f32 0.0, %v1082
      %1084 = vmatprep.mubr.f32.mxu0 0.0
      %1085 = vmatmul.mubr.f32.gmra.mrb[0].mxu0 %v343
      %v1086 = vpop.f32.mrb[0].mxu0
      %v1087 = vadd.f32 0.0, %v1086
      %v1088 = vpop.f32.mrb[0].mxu0
      %v1089 = vadd.f32 0.0, %v1088
      %1090 = vmatprep.mubr.f32.mxu0 0.0
      %1091 = vmatmul.mubr.f32.gmra.mrb[0].mxu0 %v344
      %v1092 = vpop.f32.mrb[0].mxu0
      %v1093 = vadd.f32 0.0, %v1092
      %v1094 = vpop.f32.mrb[0].mxu0
      %v1095 = vadd.f32 0.0, %v1094
      %1096 = vmatprep.mubr.f32.mxu0 0.0
      %1097 = vmatmul.mubr.f32.gmra.mrb[0].mxu0 %v345
      %v1098 = vpop.f32.mrb[0].mxu0
      %v1099 = vadd.f32 0.0, %v1098
      %v1100 = vpop.f32.mrb[0].mxu0
      %v1101 = vadd.f32 0.0, %v1100
      %1102 = vmatprep.mubr.f32.mxu0 0.0
      %1103 = vmatmul.mubr.f32.gmra.mrb[0].mxu0 %v346
      %v1104 = vpop.f32.mrb[0].mxu0
      %v1105 = vadd.f32 0.0, %v1104
      %v1106 = vpop.f32.mrb[0].mxu0
      %v1107 = vadd.f32 0.0, %v1106
      %1108 = vmatprep.mubr.f32.mxu0 0.0
      %1109 = vmatmul.mubr.f32.gmra.mrb[0].mxu0 %v347
      %v1110 = vpop.f32.mrb[0].mxu0
      %v1111 = vadd.f32 0.0, %v1110
      %v1112 = vpop.f32.mrb[0].mxu0
      %v1113 = vadd.f32 0.0, %v1112
      %1114 = vmatprep.mubr.f32.mxu0 0.0
      %1115 = vmatmul.mubr.f32.gmra.mrb[0].mxu0 %v348
      %v1116 = vpop.f32.mrb[0].mxu0
      %v1117 = vadd.f32 0.0, %v1116
      %v1118 = vpop.f32.mrb[0].mxu0
      %v1119 = vadd.f32 0.0, %v1118
      %1120 = vmatprep.mubr.f32.mxu0 0.0
      %1121 = vmatmul.mubr.f32.gmra.mrb[0].mxu0 %v349
      %v1122 = vpop.f32.mrb[0].mxu0
      %v1123 = vadd.f32 0.0, %v1122
      %v1124 = vpop.f32.mrb[0].mxu0
      %v1125 = vadd.f32 0.0, %v1124
      %1126 = vdwg.mxu0
      %v1127 = vmul.f32 %v350, %v840
      %v1128 = vmul.f32 %v351, %v842
      %v1129 = vmul.f32 %v352, %v846
      %v1130 = vmul.f32 %v353, %v848
      %v1131 = vmul.f32 %v354, %v852
      %v1132 = vmul.f32 %v355, %v854
      %v1133 = vmul.f32 %v356, %v858
      %v1134 = vmul.f32 %v357, %v860
      %v1135 = vmul.f32 %v358, %v864
      %v1136 = vmul.f32 %v359, %v866
      %v1137 = vmul.f32 %v360, %v870
      %v1138 = vmul.f32 %v361, %v872
      %v1139 = vmul.f32 %v362, %v876
      %v1140 = vmul.f32 %v363, %v878
      %v1141 = vmul.f32 %v364, %v882
      %v1142 = vmul.f32 %v365, %v884
      %v1143 = vmul.f32 %v366, %v888
      %v1144 = vmul.f32 %v367, %v890
      %v1145 = vmul.f32 %v368, %v894
      %v1146 = vmul.f32 %v369, %v896
      %v1147 = vmul.f32 %v370, %v900
      %v1148 = vmul.f32 %v371, %v902
      %v1149 = vmul.f32 %v372, %v906
      %v1150 = vmul.f32 %v373, %v908
      %v1151 = vmul.f32 %v374, %v912
      %v1152 = vmul.f32 %v375, %v914
      %v1153 = vmul.f32 %v376, %v918
      %v1154 = vmul.f32 %v377, %v920
      %v1155 = vmul.f32 %v378, %v924
      %v1156 = vmul.f32 %v379, %v926
      %v1157 = vmul.f32 %v380, %v930
      %v1158 = vmul.f32 %v381, %v932
      %v1159 = vadd.f32 %v1127, %v1033
      %v1160 = vadd.f32 %v1128, %v1035
      %v1161 = vadd.f32 %v1129, %v1039
      %v1162 = vadd.f32 %v1130, %v1041
      %v1163 = vadd.f32 %v1131, %v1045
      %v1164 = vadd.f32 %v1132, %v1047
      %v1165 = vadd.f32 %v1133, %v1051
      %v1166 = vadd.f32 %v1134, %v1053
      %v1167 = vadd.f32 %v1135, %v1057
      %v1168 = vadd.f32 %v1136, %v1059
      %v1169 = vadd.f32 %v1137, %v1063
      %v1170 = vadd.f32 %v1138, %v1065
      %v1171 = vadd.f32 %v1139, %v1069
      %v1172 = vadd.f32 %v1140, %v1071
      %v1173 = vadd.f32 %v1141, %v1075
      %v1174 = vadd.f32 %v1142, %v1077
      %v1175 = vadd.f32 %v1143, %v1081
      %v1176 = vadd.f32 %v1144, %v1083
      %v1177 = vadd.f32 %v1145, %v1087
      %v1178 = vadd.f32 %v1146, %v1089
      %v1179 = vadd.f32 %v1147, %v1093
      %v1180 = vadd.f32 %v1148, %v1095
      %v1181 = vadd.f32 %v1149, %v1099
      %v1182 = vadd.f32 %v1150, %v1101
      %v1183 = vadd.f32 %v1151, %v1105
      %v1184 = vadd.f32 %v1152, %v1107
      %v1185 = vadd.f32 %v1153, %v1111
      %v1186 = vadd.f32 %v1154, %v1113
      %v1187 = vadd.f32 %v1155, %v1117
      %v1188 = vadd.f32 %v1156, %v1119
      %v1189 = vadd.f32 %v1157, %v1123
      %v1190 = vadd.f32 %v1158, %v1125
      %s1191 = scalar_lea.vmem %s5, 3
      %v1192 = vld [vmem:[%s1191] ss:$4 sm:$0x3]
      %v1194 = vlaneseq
      %v1195 = vshrl.u32 %v1194, 7
      %v1196 = vsub.s32 0, %v1195
      %v1197 = vrot.slane %v1192, %v1196
      %v1198 = vlaneseq
      %v1199 = vshrl.u32 %v1198, 7
      %v1200 = vsub.s32 1, %v1199
      %v1201 = vrot.slane %v1192, %v1200
      %v1204 = vadd.f32 %v1159, %v1197
      %v1205 = vadd.f32 %v1160, %v1201
      %v1206 = vadd.f32 %v1161, %v1197
      %v1207 = vadd.f32 %v1162, %v1201
      %v1208 = vadd.f32 %v1163, %v1197
      %v1209 = vadd.f32 %v1164, %v1201
      %v1210 = vadd.f32 %v1165, %v1197
      %v1211 = vadd.f32 %v1166, %v1201
      %v1212 = vadd.f32 %v1167, %v1197
      %v1213 = vadd.f32 %v1168, %v1201
      %v1214 = vadd.f32 %v1169, %v1197
      %v1215 = vadd.f32 %v1170, %v1201
      %v1216 = vadd.f32 %v1171, %v1197
      %v1217 = vadd.f32 %v1172, %v1201
      %v1218 = vadd.f32 %v1173, %v1197
      %v1219 = vadd.f32 %v1174, %v1201
      %v1220 = vadd.f32 %v1175, %v1197
      %v1221 = vadd.f32 %v1176, %v1201
      %v1222 = vadd.f32 %v1177, %v1197
      %v1223 = vadd.f32 %v1178, %v1201
      %v1224 = vadd.f32 %v1179, %v1197
      %v1225 = vadd.f32 %v1180, %v1201
      %v1226 = vadd.f32 %v1181, %v1197
      %v1227 = vadd.f32 %v1182, %v1201
      %v1228 = vadd.f32 %v1183, %v1197
      %v1229 = vadd.f32 %v1184, %v1201
      %v1230 = vadd.f32 %v1185, %v1197
      %v1231 = vadd.f32 %v1186, %v1201
      %v1232 = vadd.f32 %v1187, %v1197
      %v1233 = vadd.f32 %v1188, %v1201
      %v1234 = vadd.f32 %v1189, %v1197
      %v1235 = vadd.f32 %v1190, %v1201
      %v1236 = vmax.f32 %v1204, 0.0
      %v1237 = vmax.f32 %v1205, 0.0
      %v1238 = vmax.f32 %v1206, 0.0
      %v1239 = vmax.f32 %v1207, 0.0
      %v1240 = vmax.f32 %v1208, 0.0
      %v1241 = vmax.f32 %v1209, 0.0
      %v1242 = vmax.f32 %v1210, 0.0
      %v1243 = vmax.f32 %v1211, 0.0
      %v1244 = vmax.f32 %v1212, 0.0
      %v1245 = vmax.f32 %v1213, 0.0
      %v1246 = vmax.f32 %v1214, 0.0
      %v1247 = vmax.f32 %v1215, 0.0
      %v1248 = vmax.f32 %v1216, 0.0
      %v1249 = vmax.f32 %v1217, 0.0
      %v1250 = vmax.f32 %v1218, 0.0
      %v1251 = vmax.f32 %v1219, 0.0
      %v1252 = vmax.f32 %v1220, 0.0
      %v1253 = vmax.f32 %v1221, 0.0
      %v1254 = vmax.f32 %v1222, 0.0
      %v1255 = vmax.f32 %v1223, 0.0
      %v1256 = vmax.f32 %v1224, 0.0
      %v1257 = vmax.f32 %v1225, 0.0
      %v1258 = vmax.f32 %v1226, 0.0
      %v1259 = vmax.f32 %v1227, 0.0
      %v1260 = vmax.f32 %v1228, 0.0
      %v1261 = vmax.f32 %v1229, 0.0
      %v1262 = vmax.f32 %v1230, 0.0
      %v1263 = vmax.f32 %v1231, 0.0
      %v1264 = vmax.f32 %v1232, 0.0
      %v1265 = vmax.f32 %v1233, 0.0
      %v1266 = vmax.f32 %v1234, 0.0
      %v1267 = vmax.f32 %v1235, 0.0
      %v1268 = vld [vmem:[%s6] sm:$0xff]
      %v1269 = vld [vmem:[%s6 + $0x8] sm:$0xff]
      %v1270 = vld [vmem:[%s6 + $0x10] sm:$0xff]
      %v1271 = vld [vmem:[%s6 + $0x18] sm:$0xff]
      %v1272 = vld [vmem:[%s6 + $0x20] sm:$0xff]
      %v1273 = vld [vmem:[%s6 + $0x28] sm:$0xff]
      %v1274 = vld [vmem:[%s6 + $0x30] sm:$0xff]
      %v1275 = vld [vmem:[%s6 + $0x38] sm:$0xff]
      %v1276 = vld [vmem:[%s6 + $0x40] sm:$0xff]
      %v1277 = vld [vmem:[%s6 + $0x48] sm:$0xff]
      %v1278 = vld [vmem:[%s6 + $0x50] sm:$0xff]
      %v1279 = vld [vmem:[%s6 + $0x58] sm:$0xff]
      %v1280 = vld [vmem:[%s6 + $0x60] sm:$0xff]
      %v1281 = vld [vmem:[%s6 + $0x68] sm:$0xff]
      %v1282 = vld [vmem:[%s6 + $0x70] sm:$0xff]
      %v1283 = vld [vmem:[%s6 + $0x78] sm:$0xff]
      %v1284 = vld [vmem:[%s6 + $0x80] sm:$0xff]
      %v1285 = vld [vmem:[%s6 + $0x88] sm:$0xff]
      %v1286 = vld [vmem:[%s6 + $0x90] sm:$0xff]
      %v1287 = vld [vmem:[%s6 + $0x98] sm:$0xff]
      %v1288 = vld [vmem:[%s6 + $0xa0] sm:$0xff]
      %v1289 = vld [vmem:[%s6 + $0xa8] sm:$0xff]
      %v1290 = vld [vmem:[%s6 + $0xb0] sm:$0xff]
      %v1291 = vld [vmem:[%s6 + $0xb8] sm:$0xff]
      %v1292 = vld [vmem:[%s6 + $0xc0] sm:$0xff]
      %v1293 = vld [vmem:[%s6 + $0xc8] sm:$0xff]
      %v1294 = vld [vmem:[%s6 + $0xd0] sm:$0xff]
      %v1295 = vld [vmem:[%s6 + $0xd8] sm:$0xff]
      %v1296 = vld [vmem:[%s6 + $0xe0] sm:$0xff]
      %v1297 = vld [vmem:[%s6 + $0xe8] sm:$0xff]
      %v1298 = vld [vmem:[%s6 + $0xf0] sm:$0xff]
      %v1299 = vld [vmem:[%s6 + $0xf8] sm:$0xff]
      %v1300 = vld [vmem:[%s7] sm:$0x1]
      %v1302 = vlaneseq
      %v1303 = vshrl.u32 %v1302, 7
      %v1304 = vsub.s32 0, %v1303
      %v1305 = vrot.slane %v1300, %v1304
      %1307 = vmatprep.subr.mxu0 0.0
      %1308 = vmatpush1.msra.mxu0 %v1268
      %1309 = vmatprep.subr.mxu0 0.0
      %1310 = vmatpush1.msra.mxu0 %v1269
      %1311 = vmatprep.subr.mxu0 0.0
      %1312 = vmatpush1.msra.mxu0 %v1270
      %1313 = vmatprep.subr.mxu0 0.0
      %1314 = vmatpush1.msra.mxu0 %v1271
      %1315 = vmatprep.subr.mxu0 0.0
      %1316 = vmatpush1.msra.mxu0 %v1272
      %1317 = vmatprep.subr.mxu0 0.0
      %1318 = vmatpush1.msra.mxu0 %v1273
      %1319 = vmatprep.subr.mxu0 0.0
      %1320 = vmatpush1.msra.mxu0 %v1274
      %1321 = vmatprep.subr.mxu0 0.0
      %1322 = vmatpush1.msra.mxu0 %v1275
      %1323 = vmatprep.subr.mxu0 0.0
      %1324 = vmatpush1.msra.mxu0 %v1276
      %1325 = vmatprep.subr.mxu0 0.0
      %1326 = vmatpush1.msra.mxu0 %v1277
      %1327 = vmatprep.subr.mxu0 0.0
      %1328 = vmatpush1.msra.mxu0 %v1278
      %1329 = vmatprep.subr.mxu0 0.0
      %1330 = vmatpush1.msra.mxu0 %v1279
      %1331 = vmatprep.subr.mxu0 0.0
      %1332 = vmatpush1.msra.mxu0 %v1280
      %1333 = vmatprep.subr.mxu0 0.0
      %1334 = vmatpush1.msra.mxu0 %v1281
      %1335 = vmatprep.subr.mxu0 0.0
      %1336 = vmatpush1.msra.mxu0 %v1282
      %1337 = vmatprep.subr.mxu0 0.0
      %1338 = vmatpush1.msra.mxu0 %v1283
      %1339 = vmatprep.subr.mxu0 0.0
      %1340 = vmatpush1.msra.mxu0 %v1284
      %1341 = vmatprep.subr.mxu0 0.0
      %1342 = vmatpush1.msra.mxu0 %v1285
      %1343 = vmatprep.subr.mxu0 0.0
      %1344 = vmatpush1.msra.mxu0 %v1286
      %1345 = vmatprep.subr.mxu0 0.0
      %1346 = vmatpush1.msra.mxu0 %v1287
      %1347 = vmatprep.subr.mxu0 0.0
      %1348 = vmatpush1.msra.mxu0 %v1288
      %1349 = vmatprep.subr.mxu0 0.0
      %1350 = vmatpush1.msra.mxu0 %v1289
      %1351 = vmatprep.subr.mxu0 0.0
      %1352 = vmatpush1.msra.mxu0 %v1290
      %1353 = vmatprep.subr.mxu0 0.0
      %1354 = vmatpush1.msra.mxu0 %v1291
      %1355 = vmatprep.subr.mxu0 0.0
      %1356 = vmatpush1.msra.mxu0 %v1292
      %1357 = vmatprep.subr.mxu0 0.0
      %1358 = vmatpush1.msra.mxu0 %v1293
      %1359 = vmatprep.subr.mxu0 0.0
      %1360 = vmatpush1.msra.mxu0 %v1294
      %1361 = vmatprep.subr.mxu0 0.0
      %1362 = vmatpush1.msra.mxu0 %v1295
      %1363 = vmatprep.subr.mxu0 0.0
      %1364 = vmatpush1.msra.mxu0 %v1296
      %1365 = vmatprep.subr.mxu0 0.0
      %1366 = vmatpush1.msra.mxu0 %v1297
      %1367 = vmatprep.subr.mxu0 0.0
      %1368 = vmatpush1.msra.mxu0 %v1298
      %1369 = vmatprep.subr.mxu0 0.0
      %1370 = vmatpush1.msra.mxu0 %v1299
      %1371 = vmatprep.mubr.f32.mxu0 %v1237
      %1372 = vmatmul.mubr.f32.gmra.mrb[0].mxu0 %v1236
      %v1373 = vpop.f32.mrb[0].mxu0
      %v1374 = vadd.f32 %v1305, %v1373
      %v1375 = vpop.f32.mrb[0].mxu0
      %1376 = vmatprep.mubr.f32.mxu0 %v1239
      %1377 = vmatmul.mubr.f32.gmra.mrb[0].mxu0 %v1238
      %v1378 = vpop.f32.mrb[0].mxu0
      %v1379 = vadd.f32 %v1305, %v1378
      %v1380 = vpop.f32.mrb[0].mxu0
      %1381 = vmatprep.mubr.f32.mxu0 %v1241
      %1382 = vmatmul.mubr.f32.gmra.mrb[0].mxu0 %v1240
      %v1383 = vpop.f32.mrb[0].mxu0
      %v1384 = vadd.f32 %v1305, %v1383
      %v1385 = vpop.f32.mrb[0].mxu0
      %1386 = vmatprep.mubr.f32.mxu0 %v1243
      %1387 = vmatmul.mubr.f32.gmra.mrb[0].mxu0 %v1242
      %v1388 = vpop.f32.mrb[0].mxu0
      %v1389 = vadd.f32 %v1305, %v1388
      %v1390 = vpop.f32.mrb[0].mxu0
      %1391 = vmatprep.mubr.f32.mxu0 %v1245
      %1392 = vmatmul.mubr.f32.gmra.mrb[0].mxu0 %v1244
      %v1393 = vpop.f32.mrb[0].mxu0
      %v1394 = vadd.f32 %v1305, %v1393
      %v1395 = vpop.f32.mrb[0].mxu0
      %1396 = vmatprep.mubr.f32.mxu0 %v1247
      %1397 = vmatmul.mubr.f32.gmra.mrb[0].mxu0 %v1246
      %v1398 = vpop.f32.mrb[0].mxu0
      %v1399 = vadd.f32 %v1305, %v1398
      %v1400 = vpop.f32.mrb[0].mxu0
      %1401 = vmatprep.mubr.f32.mxu0 %v1249
      %1402 = vmatmul.mubr.f32.gmra.mrb[0].mxu0 %v1248
      %v1403 = vpop.f32.mrb[0].mxu0
      %v1404 = vadd.f32 %v1305, %v1403
      %v1405 = vpop.f32.mrb[0].mxu0
      %1406 = vmatprep.mubr.f32.mxu0 %v1251
      %1407 = vmatmul.mubr.f32.gmra.mrb[0].mxu0 %v1250
      %v1408 = vpop.f32.mrb[0].mxu0
      %v1409 = vadd.f32 %v1305, %v1408
      %v1410 = vpop.f32.mrb[0].mxu0
      %1411 = vmatprep.mubr.f32.mxu0 %v1253
      %1412 = vmatmul.mubr.f32.gmra.mrb[0].mxu0 %v1252
      %v1413 = vpop.f32.mrb[0].mxu0
      %v1414 = vadd.f32 %v1305, %v1413
      %v1415 = vpop.f32.mrb[0].mxu0
      %1416 = vmatprep.mubr.f32.mxu0 %v1255
      %1417 = vmatmul.mubr.f32.gmra.mrb[0].mxu0 %v1254
      %v1418 = vpop.f32.mrb[0].mxu0
      %v1419 = vadd.f32 %v1305, %v1418
      %v1420 = vpop.f32.mrb[0].mxu0
      %1421 = vmatprep.mubr.f32.mxu0 %v1257
      %1422 = vmatmul.mubr.f32.gmra.mrb[0].mxu0 %v1256
      %v1423 = vpop.f32.mrb[0].mxu0
      %v1424 = vadd.f32 %v1305, %v1423
      %v1425 = vpop.f32.mrb[0].mxu0
      %1426 = vmatprep.mubr.f32.mxu0 %v1259
      %1427 = vmatmul.mubr.f32.gmra.mrb[0].mxu0 %v1258
      %v1428 = vpop.f32.mrb[0].mxu0
      %v1429 = vadd.f32 %v1305, %v1428
      %v1430 = vpop.f32.mrb[0].mxu0
      %1431 = vmatprep.mubr.f32.mxu0 %v1261
      %1432 = vmatmul.mubr.f32.gmra.mrb[0].mxu0 %v1260
      %v1433 = vpop.f32.mrb[0].mxu0
      %v1434 = vadd.f32 %v1305, %v1433
      %v1435 = vpop.f32.mrb[0].mxu0
      %1436 = vmatprep.mubr.f32.mxu0 %v1263
      %1437 = vmatmul.mubr.f32.gmra.mrb[0].mxu0 %v1262
      %v1438 = vpop.f32.mrb[0].mxu0
      %v1439 = vadd.f32 %v1305, %v1438
      %v1440 = vpop.f32.mrb[0].mxu0
      %1441 = vmatprep.mubr.f32.mxu0 %v1265
      %1442 = vmatmul.mubr.f32.gmra.mrb[0].mxu0 %v1264
      %v1443 = vpop.f32.mrb[0].mxu0
      %v1444 = vadd.f32 %v1305, %v1443
      %v1445 = vpop.f32.mrb[0].mxu0
      %1446 = vmatprep.mubr.f32.mxu0 %v1267
      %1447 = vmatmul.mubr.f32.gmra.mrb[0].mxu0 %v1266
      %v1448 = vpop.f32.mrb[0].mxu0
      %v1449 = vadd.f32 %v1305, %v1448
      %v1450 = vpop.f32.mrb[0].mxu0
      %1451 = vdwg.mxu0
      %1452 = vst [vmem:[%s332] sm:$0xff] %v1374
      %1453 = vst [vmem:[%s332 + $0x8] sm:$0xff] %v1379
      %1454 = vst [vmem:[%s332 + $0x10] sm:$0xff] %v1384
      %1455 = vst [vmem:[%s332 + $0x18] sm:$0xff] %v1389
      %1456 = vst [vmem:[%s332 + $0x20] sm:$0xff] %v1394
      %1457 = vst [vmem:[%s332 + $0x28] sm:$0xff] %v1399
      %1458 = vst [vmem:[%s332 + $0x30] sm:$0xff] %v1404
      %1459 = vst [vmem:[%s332 + $0x38] sm:$0xff] %v1409
      %1460 = vst [vmem:[%s332 + $0x40] sm:$0xff] %v1414
      %1461 = vst [vmem:[%s332 + $0x48] sm:$0xff] %v1419
      %1462 = vst [vmem:[%s332 + $0x50] sm:$0xff] %v1424
      %1463 = vst [vmem:[%s332 + $0x58] sm:$0xff] %v1429
      %1464 = vst [vmem:[%s332 + $0x60] sm:$0xff] %v1434
      %1465 = vst [vmem:[%s332 + $0x68] sm:$0xff] %v1439
      %1466 = vst [vmem:[%s332 + $0x70] sm:$0xff] %v1444
      %1467 = vst [vmem:[%s332 + $0x78] sm:$0xff] %v1449
      %s1468 = smul.u32 16, %s19
      %p1469 = scmp.lt.s32.totalorder %s1468, 31
      %s1470 = scalar_select %p1469, %s1468, 31
      %s1471 = smul.addr %s1470, 8
      %s1472 = scalar_lea.vmem %s8, %s1471
      // Predicated region
      $region53: #{pgnn_forward.2} parent=51 // pred_check
        %p1473 = pneg %p215
      $region54: #{pgnn_forward.2} parent=51 // pred_check_branch
        %1475 = sbr.rel (%p1473) target = $region56
      $region55: #{pgnn_forward.2} parent=51 // pred_region
        %s1476 = smul.u32 16, %s19
      $region56: #{pgnn_forward.2} parent=51 // pred_fallthru
        _
    $region52: #{pgnn_forward.2} parent=5 // pred_fallthru
      _
    %p1477 = scmp.le.s32.totalorder 2, %s14
    // Predicated region
    $region57: #{pgnn_forward.2} parent=5 // pred_check
      %p1478 = pneg %p1477
    $region58: #{pgnn_forward.2} parent=5 // pred_check_branch
      %1480 = sbr.rel (%p1478) target = $region60
    $region59: #{pgnn_forward.2} parent=5 // pred_region
      %s1481 = ssub.s32 %s14, 2
      // Predicated region
      $region61: #{pgnn_forward.2} parent=59 // pred_check
        %p1482 = pneg %p221
      $region62: #{pgnn_forward.2} parent=59 // pred_check_branch
        %1484 = sbr.rel (%p1482) target = $region64
      $region63: #{pgnn_forward.2} parent=59 // pred_region
        %s1485 = smul.u32 16, %s20
        %p1486 = scmp.lt.s32.totalorder %s1485, 31
        %s1487 = scalar_select %p1486, %s1485, 31
        %s1488 = smul.addr %s1487, 8
        %s1489 = scalar_lea.vmem %s8, %s1488
      $region64: #{pgnn_forward.2} parent=59 // pred_fallthru
        _
    $region60: #{pgnn_forward.2} parent=5 // pred_fallthru
      _
  $region6: #{pgnn_forward.2} parent=0 // loop_footer
    %s18 = sadd.s32 1, %s14
  $region7: #{pgnn_forward.2} parent=0 // loop_footer_branch
    %13 = sbr.rel target = $region3
  $region8: #{pgnn_forward.2} parent=0 // loop_exit
    _

// kernel: pgnn_forward.3
$region0: #{pgnn_forward.3}
  #allocation0 [shape = 'u32[]', space=smem, size = 0x4, offset = 0x4, fixed_abs, tag = 'smem constant byte address 0x4 - core index']
  #allocation1 [shape = 'u32[144,128]{1,0:T(1,128)}', space=vmem, size = 0x12000, scoped, tag = 'internal scratch']
  %s0 = inlined_call_operand.vmem [shape: f32[256,128], index: 0, kind: input, shape index: {}]
  %s1 = inlined_call_operand.vmem [shape: f32[256,128], index: 1, kind: input, shape index: {}]
  %s2 = inlined_call_operand.vmem [shape: f32[128,128], index: 2, kind: input, shape index: {}]
  %s3 = inlined_call_operand.vmem [shape: f32[128,128], index: 3, kind: input, shape index: {}]
  %s4 = inlined_call_operand.vmem [shape: f32[128,128], index: 4, kind: input, shape index: {}]
  %s5 = inlined_call_operand.vmem [shape: f32[4,128], index: 5, kind: input, shape index: {}]
  %s6 = inlined_call_operand.vmem [shape: f32[128,128], index: 6, kind: input, shape index: {}]
  %s7 = inlined_call_operand.vmem [shape: f32[1,128], index: 7, kind: input, shape index: {}]
  %s8 = inlined_call_operand.vmem [shape: f32[256,128], index: 8, kind: output, shape index: {}]
  %s9 = sld [smem:[#allocation0]]
  $region65: #{pgnn_forward.3} parent=0
    _
  %s11 = ssub.s32 1, %s9
  %s12 = scalar_select 0, %s11, %s9
  loop: start=0, step=1, limit=4
  $region2: #{pgnn_forward.3} parent=0 // loop_pre_header
    _
  $region3: #{pgnn_forward.3} parent=0 // loop_header
    %s14 = sphi 0, %s18
    %p15 = scmp.ge.s32.totalorder %s14, 4
    %s24 = sphi 0, %s26
    %s27 = sphi 0, %s24
    %s28 = sphi 0, %s27
    %s44 = sphi 0, %s28
    %s50 = sphi 0, %s52
    %s53 = sphi 0, %s50
    %s54 = sphi 0, %s53
    %s70 = sphi 0, %s54
    %s74 = sphi 0, %s74
    %s76 = sphi 0, %s74
    %s77 = sphi 0, %s76
    %s91 = sphi 0, %s77
    %s95 = sphi 0, %s95
    %s97 = sphi 0, %s95
    %s98 = sphi 0, %s97
    %s112 = sphi 0, %s98
    %s116 = sphi 0, %s116
    %s118 = sphi 0, %s116
    %s119 = sphi 0, %s118
    %s133 = sphi 0, %s119
    %s137 = sphi 0, %s137
    %s139 = sphi 0, %s137
    %s140 = sphi 0, %s139
    %s154 = sphi 0, %s140
    %s158 = sphi 0, %s158
    %s160 = sphi 0, %s158
    %s161 = sphi 0, %s160
    %s175 = sphi 0, %s161
    %s179 = sphi 0, %s179
    %s181 = sphi 0, %s179
    %s182 = sphi 0, %s181
    %s196 = sphi 0, %s182
    %s202 = sphi 0, %s204
    %s205 = sphi 0, %s202
    %s206 = sphi 0, %s205
    %s222 = sphi 0, %s206
  $region4: #{pgnn_forward.3} parent=0 // loop_header_branch
    %17 = sbr.rel (%p15) target = $region8
  $region5: #{pgnn_forward.3} parent=0 // loop_body
    %s19 = ssub.s32 %s14, 1
    %s20 = ssub.s32 %s14, 2
    %s21 = sadd.s32 %s14, 1
    %s22 = ssub.s32 %s14, %s21
    %p23 = scmp.eq.s32.totalorder %s22, 0
    %s25 = sadd.s32 %s24, 1
    %s26 = scalar_select %p23, %s24, %s25
    %p29 = pneg %p23
    %p30 = scmp.eq.s32.totalorder %s14, 1
    %p31 = por %p29, %p30
    %p32 = scmp.ne.s32.totalorder %s24, %s27
    %p33 = scmp.eq.s32.totalorder %s14, 0
    %p34 = por %p32, %p33
    %p35 = scmp.ne.s32.totalorder %s24, %s27
    %p36 = scmp.eq.s32.totalorder %s19, 1
    %p37 = por %p35, %p36
    %p38 = scmp.ne.s32.totalorder %s27, %s28
    %p39 = scmp.eq.s32.totalorder %s19, 0
    %p40 = por %p38, %p39
    %p41 = scmp.ne.s32.totalorder %s27, %s28
    %p42 = scmp.eq.s32.totalorder %s20, 1
    %p43 = por %p41, %p42
    %p45 = scmp.ne.s32.totalorder %s28, %s44
    %p46 = scmp.eq.s32.totalorder %s20, 0
    %p47 = por %p45, %p46
    %s48 = ssub.s32 %s14, %s21
    %p49 = scmp.eq.s32.totalorder %s48, 0
    %s51 = sadd.s32 %s50, 1
    %s52 = scalar_select %p49, %s50, %s51
    %p55 = pneg %p49
    %p56 = scmp.eq.s32.totalorder %s14, 1
    %p57 = por %p55, %p56
    %p58 = scmp.ne.s32.totalorder %s50, %s53
    %p59 = scmp.eq.s32.totalorder %s14, 0
    %p60 = por %p58, %p59
    %p61 = scmp.ne.s32.totalorder %s50, %s53
    %p62 = scmp.eq.s32.totalorder %s19, 1
    %p63 = por %p61, %p62
    %p64 = scmp.ne.s32.totalorder %s53, %s54
    %p65 = scmp.eq.s32.totalorder %s19, 0
    %p66 = por %p64, %p65
    %p67 = scmp.ne.s32.totalorder %s53, %s54
    %p68 = scmp.eq.s32.totalorder %s20, 1
    %p69 = por %p67, %p68
    %p71 = scmp.ne.s32.totalorder %s54, %s70
    %p72 = scmp.eq.s32.totalorder %s20, 0
    %p73 = por %p71, %p72
    %s75 = sadd.s32 %s74, 1
    %p78 = scmp.eq.s32.totalorder %s14, 1
    %p79 = scmp.ne.s32.totalorder %s74, %s76
    %p80 = scmp.eq.s32.totalorder %s14, 0
    %p81 = por %p79, %p80
    %p82 = scmp.ne.s32.totalorder %s74, %s76
    %p83 = scmp.eq.s32.totalorder %s19, 1
    %p84 = por %p82, %p83
    %p85 = scmp.ne.s32.totalorder %s76, %s77
    %p86 = scmp.eq.s32.totalorder %s19, 0
    %p87 = por %p85, %p86
    %p88 = scmp.ne.s32.totalorder %s76, %s77
    %p89 = scmp.eq.s32.totalorder %s20, 1
    %p90 = por %p88, %p89
    %p92 = scmp.ne.s32.totalorder %s77, %s91
    %p93 = scmp.eq.s32.totalorder %s20, 0
    %p94 = por %p92, %p93
    %s96 = sadd.s32 %s95, 1
    %p99 = scmp.eq.s32.totalorder %s14, 1
    %p100 = scmp.ne.s32.totalorder %s95, %s97
    %p101 = scmp.eq.s32.totalorder %s14, 0
    %p102 = por %p100, %p101
    %p103 = scmp.ne.s32.totalorder %s95, %s97
    %p104 = scmp.eq.s32.totalorder %s19, 1
    %p105 = por %p103, %p104
    %p106 = scmp.ne.s32.totalorder %s97, %s98
    %p107 = scmp.eq.s32.totalorder %s19, 0
    %p108 = por %p106, %p107
    %p109 = scmp.ne.s32.totalorder %s97, %s98
    %p110 = scmp.eq.s32.totalorder %s20, 1
    %p111 = por %p109, %p110
    %p113 = scmp.ne.s32.totalorder %s98, %s112
    %p114 = scmp.eq.s32.totalorder %s20, 0
    %p115 = por %p113, %p114
    %s117 = sadd.s32 %s116, 1
    %p120 = scmp.eq.s32.totalorder %s14, 1
    %p121 = scmp.ne.s32.totalorder %s116, %s118
    %p122 = scmp.eq.s32.totalorder %s14, 0
    %p123 = por %p121, %p122
    %p124 = scmp.ne.s32.totalorder %s116, %s118
    %p125 = scmp.eq.s32.totalorder %s19, 1
    %p126 = por %p124, %p125
    %p127 = scmp.ne.s32.totalorder %s118, %s119
    %p128 = scmp.eq.s32.totalorder %s19, 0
    %p129 = por %p127, %p128
    %p130 = scmp.ne.s32.totalorder %s118, %s119
    %p131 = scmp.eq.s32.totalorder %s20, 1
    %p132 = por %p130, %p131
    %p134 = scmp.ne.s32.totalorder %s119, %s133
    %p135 = scmp.eq.s32.totalorder %s20, 0
    %p136 = por %p134, %p135
    %s138 = sadd.s32 %s137, 1
    %p141 = scmp.eq.s32.totalorder %s14, 1
    %p142 = scmp.ne.s32.totalorder %s137, %s139
    %p143 = scmp.eq.s32.totalorder %s14, 0
    %p144 = por %p142, %p143
    %p145 = scmp.ne.s32.totalorder %s137, %s139
    %p146 = scmp.eq.s32.totalorder %s19, 1
    %p147 = por %p145, %p146
    %p148 = scmp.ne.s32.totalorder %s139, %s140
    %p149 = scmp.eq.s32.totalorder %s19, 0
    %p150 = por %p148, %p149
    %p151 = scmp.ne.s32.totalorder %s139, %s140
    %p152 = scmp.eq.s32.totalorder %s20, 1
    %p153 = por %p151, %p152
    %p155 = scmp.ne.s32.totalorder %s140, %s154
    %p156 = scmp.eq.s32.totalorder %s20, 0
    %p157 = por %p155, %p156
    %s159 = sadd.s32 %s158, 1
    %p162 = scmp.eq.s32.totalorder %s14, 1
    %p163 = scmp.ne.s32.totalorder %s158, %s160
    %p164 = scmp.eq.s32.totalorder %s14, 0
    %p165 = por %p163, %p164
    %p166 = scmp.ne.s32.totalorder %s158, %s160
    %p167 = scmp.eq.s32.totalorder %s19, 1
    %p168 = por %p166, %p167
    %p169 = scmp.ne.s32.totalorder %s160, %s161
    %p170 = scmp.eq.s32.totalorder %s19, 0
    %p171 = por %p169, %p170
    %p172 = scmp.ne.s32.totalorder %s160, %s161
    %p173 = scmp.eq.s32.totalorder %s20, 1
    %p174 = por %p172, %p173
    %p176 = scmp.ne.s32.totalorder %s161, %s175
    %p177 = scmp.eq.s32.totalorder %s20, 0
    %p178 = por %p176, %p177
    %s180 = sadd.s32 %s179, 1
    %p183 = scmp.eq.s32.totalorder %s14, 1
    %p184 = scmp.ne.s32.totalorder %s179, %s181
    %p185 = scmp.eq.s32.totalorder %s14, 0
    %p186 = por %p184, %p185
    %p187 = scmp.ne.s32.totalorder %s179, %s181
    %p188 = scmp.eq.s32.totalorder %s19, 1
    %p189 = por %p187, %p188
    %p190 = scmp.ne.s32.totalorder %s181, %s182
    %p191 = scmp.eq.s32.totalorder %s19, 0
    %p192 = por %p190, %p191
    %p193 = scmp.ne.s32.totalorder %s181, %s182
    %p194 = scmp.eq.s32.totalorder %s20, 1
    %p195 = por %p193, %p194
    %p197 = scmp.ne.s32.totalorder %s182, %s196
    %p198 = scmp.eq.s32.totalorder %s20, 0
    %p199 = por %p197, %p198
    %s200 = ssub.s32 %s14, %s21
    %p201 = scmp.eq.s32.totalorder %s200, 0
    %s203 = sadd.s32 %s202, 1
    %s204 = scalar_select %p201, %s202, %s203
    %p207 = pneg %p201
    %p208 = scmp.eq.s32.totalorder %s14, 1
    %p209 = por %p207, %p208
    %p210 = scmp.ne.s32.totalorder %s202, %s205
    %p211 = scmp.eq.s32.totalorder %s14, 0
    %p212 = por %p210, %p211
    %p213 = scmp.ne.s32.totalorder %s202, %s205
    %p214 = scmp.eq.s32.totalorder %s19, 1
    %p215 = por %p213, %p214
    %p216 = scmp.ne.s32.totalorder %s205, %s206
    %p217 = scmp.eq.s32.totalorder %s19, 0
    %p218 = por %p216, %p217
    %p219 = scmp.ne.s32.totalorder %s205, %s206
    %p220 = scmp.eq.s32.totalorder %s20, 1
    %p221 = por %p219, %p220
    %p223 = scmp.ne.s32.totalorder %s206, %s222
    %p224 = scmp.eq.s32.totalorder %s20, 0
    %p225 = por %p223, %p224
    %p226 = scmp.le.s32.totalorder 1, %s14
    %p227 = scmp.lt.s32.totalorder %s14, 3
    %p228 = pnand %p226, %p227
    %p229 = pneg %p228
    // Predicated region
    $region9: #{pgnn_forward.3} parent=5 // pred_check
      _
    $region10: #{pgnn_forward.3} parent=5 // pred_check_branch
      %231 = sbr.rel (%p228) target = $region12
    $region11: #{pgnn_forward.3} parent=5 // pred_region
      %s232 = ssub.s32 %s14, 1
      // Predicated region
      $region13: #{pgnn_forward.3} parent=11 // pred_check
        %p233 = pneg %p87
      $region14: #{pgnn_forward.3} parent=11 // pred_check_branch
        %235 = sbr.rel (%p233) target = $region16
      $region15: #{pgnn_forward.3} parent=11 // pred_region
        _
      $region16: #{pgnn_forward.3} parent=11 // pred_fallthru
        _
      // Predicated region
      $region17: #{pgnn_forward.3} parent=11 // pred_check
        %p236 = pneg %p108
      $region18: #{pgnn_forward.3} parent=11 // pred_check_branch
        %238 = sbr.rel (%p236) target = $region20
      $region19: #{pgnn_forward.3} parent=11 // pred_region
        _
      $region20: #{pgnn_forward.3} parent=11 // pred_fallthru
        _
      // Predicated region
      $region21: #{pgnn_forward.3} parent=11 // pred_check
        %p239 = pneg %p129
      $region22: #{pgnn_forward.3} parent=11 // pred_check_branch
        %241 = sbr.rel (%p239) target = $region24
      $region23: #{pgnn_forward.3} parent=11 // pred_region
        _
      $region24: #{pgnn_forward.3} parent=11 // pred_fallthru
        _
      // Predicated region
      $region25: #{pgnn_forward.3} parent=11 // pred_check
        %p242 = pneg %p150
      $region26: #{pgnn_forward.3} parent=11 // pred_check_branch
        %244 = sbr.rel (%p242) target = $region28
      $region27: #{pgnn_forward.3} parent=11 // pred_region
        _
      $region28: #{pgnn_forward.3} parent=11 // pred_fallthru
        _
      // Predicated region
      $region29: #{pgnn_forward.3} parent=11 // pred_check
        %p245 = pneg %p171
      $region30: #{pgnn_forward.3} parent=11 // pred_check_branch
        %247 = sbr.rel (%p245) target = $region32
      $region31: #{pgnn_forward.3} parent=11 // pred_region
        _
      $region32: #{pgnn_forward.3} parent=11 // pred_fallthru
        _
      // Predicated region
      $region33: #{pgnn_forward.3} parent=11 // pred_check
        %p248 = pneg %p192
      $region34: #{pgnn_forward.3} parent=11 // pred_check_branch
        %250 = sbr.rel (%p248) target = $region36
      $region35: #{pgnn_forward.3} parent=11 // pred_region
        _
      $region36: #{pgnn_forward.3} parent=11 // pred_fallthru
        _
    $region12: #{pgnn_forward.3} parent=5 // pred_fallthru
      _
    %p251 = scmp.lt.s32.totalorder %s14, 2
    // Predicated region
    $region37: #{pgnn_forward.3} parent=5 // pred_check
      %p252 = pneg %p251
    $region38: #{pgnn_forward.3} parent=5 // pred_check_branch
      %254 = sbr.rel (%p252) target = $region40
    $region39: #{pgnn_forward.3} parent=5 // pred_region
      // Predicated region
      $region41: #{pgnn_forward.3} parent=39 // pred_check
        %p255 = pneg %p34
      $region42: #{pgnn_forward.3} parent=39 // pred_check_branch
        %257 = sbr.rel (%p255) target = $region44
      $region43: #{pgnn_forward.3} parent=39 // pred_region
        %s258 = smul.u32 16, %s14
        %p259 = scmp.lt.s32.totalorder %s258, 31
        %s260 = scalar_select %p259, %s258, 31
        %s261 = smul.addr %s260, 8
        %s262 = scalar_lea.vmem %s0, %s261
        %s263 = smul.u32 16, %s14
      $region44: #{pgnn_forward.3} parent=39 // pred_fallthru
        _
      // Predicated region
      $region45: #{pgnn_forward.3} parent=39 // pred_check
        %p264 = pneg %p60
      $region46: #{pgnn_forward.3} parent=39 // pred_check_branch
        %266 = sbr.rel (%p264) target = $region48
      $region47: #{pgnn_forward.3} parent=39 // pred_region
        %s267 = smul.u32 16, %s14
        %p268 = scmp.lt.s32.totalorder %s267, 31
        %s269 = scalar_select %p268, %s267, 31
        %s270 = smul.addr %s269, 8
        %s271 = scalar_lea.vmem %s1, %s270
        %s272 = smul.u32 16, %s14
      $region48: #{pgnn_forward.3} parent=39 // pred_fallthru
        _
    $region40: #{pgnn_forward.3} parent=5 // pred_fallthru
      _
    %p273 = scmp.le.s32.totalorder 1, %s14
    %p274 = scmp.lt.s32.totalorder %s14, 3
    %p275 = pnand %p273, %p274
    %p276 = pneg %p275
    // Predicated region
    $region49: #{pgnn_forward.3} parent=5 // pred_check
      _
    $region50: #{pgnn_forward.3} parent=5 // pred_check_branch
      %278 = sbr.rel (%p275) target = $region52
    $region51: #{pgnn_forward.3} parent=5 // pred_region
      %s279 = ssub.s32 %s14, 1
      %s280 = smul.u32 16, %s19
      %p281 = scmp.lt.s32.totalorder %s280, 31
      %s282 = scalar_select %p281, %s280, 31
      %s283 = smul.addr %s282, 8
      %s284 = scalar_lea.vmem %s0, %s283
      %p285 = pneg %p40
      %p286 = pneg %p37
      %s287 = smul.u32 16, %s19
      %p288 = scmp.lt.s32.totalorder %s287, 31
      %s289 = scalar_select %p288, %s287, 31
      %s290 = smul.addr %s289, 8
      %s291 = scalar_lea.vmem %s1, %s290
      %p292 = pneg %p66
      %p293 = pneg %p63
      %p294 = pneg %p87
      %p295 = pneg %p84
      %p296 = pneg %p108
      %p297 = pneg %p105
      %p298 = pneg %p129
      %p299 = pneg %p126
      %p300 = pneg %p150
      %p301 = pneg %p147
      %p302 = pneg %p171
      %p303 = pneg %p168
      %p304 = pneg %p192
      %p305 = pneg %p189
      %p306 = pneg %p218
      %p307 = pneg %p215
      %s308 = smul.u32 16, %s19
      %p309 = scmp.lt.s32.totalorder %s308, 31
      %s310 = scalar_select %p309, %s308, 31
      %s311 = smul.addr %s310, 8
      %s312 = scalar_lea.vmem %s8, %s311
      %s313 = smul.u32 16, %s19
      %p314 = scmp.lt.s32.totalorder %s313, 31
      %s315 = scalar_select %p314, %s313, 31
      %s316 = smul.addr %s315, 8
      %s317 = scalar_lea.vmem %s0, %s316
      %s318 = smul.u32 16, %s19
      %s319 = smul.u32 16, %s19
      %p320 = scmp.lt.s32.totalorder %s319, 31
      %s321 = scalar_select %p320, %s319, 31
      %s322 = smul.addr %s321, 8
      %s323 = scalar_lea.vmem %s1, %s322
      %s324 = smul.u32 16, %s19
      %s325 = smul.u32 16, %s19
      %p326 = scmp.lt.s32.totalorder %s325, 31
      %s327 = scalar_select %p326, %s325, 31
      %s328 = smul.addr %s327, 8
      %s329 = scalar_lea.vmem %s8, %s328
      %s330 = smul.u32 16, %s19
      %v331 = vld [vmem:[%s323] sm:$0xff]
      %v332 = vld [vmem:[%s323 + $0x8] sm:$0xff]
      %v333 = vld [vmem:[%s323 + $0x10] sm:$0xff]
      %v334 = vld [vmem:[%s323 + $0x18] sm:$0xff]
      %v335 = vld [vmem:[%s323 + $0x20] sm:$0xff]
      %v336 = vld [vmem:[%s323 + $0x28] sm:$0xff]
      %v337 = vld [vmem:[%s323 + $0x30] sm:$0xff]
      %v338 = vld [vmem:[%s323 + $0x38] sm:$0xff]
      %v339 = vld [vmem:[%s323 + $0x40] sm:$0xff]
      %v340 = vld [vmem:[%s323 + $0x48] sm:$0xff]
      %v341 = vld [vmem:[%s323 + $0x50] sm:$0xff]
      %v342 = vld [vmem:[%s323 + $0x58] sm:$0xff]
      %v343 = vld [vmem:[%s323 + $0x60] sm:$0xff]
      %v344 = vld [vmem:[%s323 + $0x68] sm:$0xff]
      %v345 = vld [vmem:[%s323 + $0x70] sm:$0xff]
      %v346 = vld [vmem:[%s323 + $0x78] sm:$0xff]
      %v347 = vld [vmem:[%s317] sm:$0xff]
      %v348 = vld [vmem:[%s317 + $0x8] sm:$0xff]
      %v349 = vld [vmem:[%s317 + $0x10] sm:$0xff]
      %v350 = vld [vmem:[%s317 + $0x18] sm:$0xff]
      %v351 = vld [vmem:[%s317 + $0x20] sm:$0xff]
      %v352 = vld [vmem:[%s317 + $0x28] sm:$0xff]
      %v353 = vld [vmem:[%s317 + $0x30] sm:$0xff]
      %v354 = vld [vmem:[%s317 + $0x38] sm:$0xff]
      %v355 = vld [vmem:[%s317 + $0x40] sm:$0xff]
      %v356 = vld [vmem:[%s317 + $0x48] sm:$0xff]
      %v357 = vld [vmem:[%s317 + $0x50] sm:$0xff]
      %v358 = vld [vmem:[%s317 + $0x58] sm:$0xff]
      %v359 = vld [vmem:[%s317 + $0x60] sm:$0xff]
      %v360 = vld [vmem:[%s317 + $0x68] sm:$0xff]
      %v361 = vld [vmem:[%s317 + $0x70] sm:$0xff]
      %v362 = vld [vmem:[%s317 + $0x78] sm:$0xff]
      %v363 = vld [vmem:[%s2] sm:$0xff]
      %v364 = vld [vmem:[%s2 + $0x8] sm:$0xff]
      %v365 = vld [vmem:[%s2 + $0x10] sm:$0xff]
      %v366 = vld [vmem:[%s2 + $0x18] sm:$0xff]
      %v367 = vld [vmem:[%s2 + $0x20] sm:$0xff]
      %v368 = vld [vmem:[%s2 + $0x28] sm:$0xff]
      %v369 = vld [vmem:[%s2 + $0x30] sm:$0xff]
      %v370 = vld [vmem:[%s2 + $0x38] sm:$0xff]
      %v371 = vld [vmem:[%s2 + $0x40] sm:$0xff]
      %v372 = vld [vmem:[%s2 + $0x48] sm:$0xff]
      %v373 = vld [vmem:[%s2 + $0x50] sm:$0xff]
      %v374 = vld [vmem:[%s2 + $0x58] sm:$0xff]
      %v375 = vld [vmem:[%s2 + $0x60] sm:$0xff]
      %v376 = vld [vmem:[%s2 + $0x68] sm:$0xff]
      %v377 = vld [vmem:[%s2 + $0x70] sm:$0xff]
      %v378 = vld [vmem:[%s2 + $0x78] sm:$0xff]
      %379 = vmatprep.subr.mxu0 0.0
      %380 = vmatpush1.msra.mxu0 %v363
      %381 = vmatprep.subr.mxu0 0.0
      %382 = vmatpush1.msra.mxu0 %v364
      %383 = vmatprep.subr.mxu0 0.0
      %384 = vmatpush1.msra.mxu0 %v365
      %385 = vmatprep.subr.mxu0 0.0
      %386 = vmatpush1.msra.mxu0 %v366
      %387 = vmatprep.subr.mxu0 0.0
      %388 = vmatpush1.msra.mxu0 %v367
      %389 = vmatprep.subr.mxu0 0.0
      %390 = vmatpush1.msra.mxu0 %v368
      %391 = vmatprep.subr.mxu0 0.0
      %392 = vmatpush1.msra.mxu0 %v369
      %393 = vmatprep.subr.mxu0 0.0
      %394 = vmatpush1.msra.mxu0 %v370
      %395 = vmatprep.subr.mxu0 0.0
      %396 = vmatpush1.msra.mxu0 %v371
      %397 = vmatprep.subr.mxu0 0.0
      %398 = vmatpush1.msra.mxu0 %v372
      %399 = vmatprep.subr.mxu0 0.0
      %400 = vmatpush1.msra.mxu0 %v373
      %401 = vmatprep.subr.mxu0 0.0
      %402 = vmatpush1.msra.mxu0 %v374
      %403 = vmatprep.subr.mxu0 0.0
      %404 = vmatpush1.msra.mxu0 %v375
      %405 = vmatprep.subr.mxu0 0.0
      %406 = vmatpush1.msra.mxu0 %v376
      %407 = vmatprep.subr.mxu0 0.0
      %408 = vmatpush1.msra.mxu0 %v377
      %409 = vmatprep.subr.mxu0 0.0
      %410 = vmatpush1.msra.mxu0 %v378
      %411 = vmatprep.subr.mxu0 0.0
      %412 = vmatpush1.msra.mxu0 0.0
      %413 = vmatprep.subr.mxu0 0.0
      %414 = vmatpush1.msra.mxu0 0.0
      %415 = vmatprep.subr.mxu0 0.0
      %416 = vmatpush1.msra.mxu0 0.0
      %417 = vmatprep.subr.mxu0 0.0
      %418 = vmatpush1.msra.mxu0 0.0
      %419 = vmatprep.subr.mxu0 0.0
      %420 = vmatpush1.msra.mxu0 0.0
      %421 = vmatprep.subr.mxu0 0.0
      %422 = vmatpush1.msra.mxu0 0.0
      %423 = vmatprep.subr.mxu0 0.0
      %424 = vmatpush1.msra.mxu0 0.0
      %425 = vmatprep.subr.mxu0 0.0
      %426 = vmatpush1.msra.mxu0 0.0
      %427 = vmatprep.subr.mxu0 0.0
      %428 = vmatpush1.msra.mxu0 0.0
      %429 = vmatprep.subr.mxu0 0.0
      %430 = vmatpush1.msra.mxu0 0.0
      %431 = vmatprep.subr.mxu0 0.0
      %432 = vmatpush1.msra.mxu0 0.0
      %433 = vmatprep.subr.mxu0 0.0
      %434 = vmatpush1.msra.mxu0 0.0
      %435 = vmatprep.subr.mxu0 0.0
      %436 = vmatpush1.msra.mxu0 0.0
      %437 = vmatprep.subr.mxu0 0.0
      %438 = vmatpush1.msra.mxu0 0.0
      %439 = vmatprep.subr.mxu0 0.0
      %440 = vmatpush1.msra.mxu0 0.0
      %441 = vmatprep.subr.mxu0 0.0
      %442 = vmatpush1.msra.mxu0 0.0
      %443 = vmatprep.mubr.f32.mxu0 0.0
      %444 = vmatmul.mubr.f32.gmra.mrb[0].mxu0 %v331
      %v445 = vpop.f32.mrb[0].mxu0
      %v446 = vadd.f32 0.0, %v445
      %v447 = vpop.f32.mrb[0].mxu0
      %448 = vmatprep.mubr.f32.mxu0 0.0
      %449 = vmatmul.mubr.f32.gmra.mrb[0].mxu0 %v332
      %v450 = vpop.f32.mrb[0].mxu0
      %v451 = vadd.f32 0.0, %v450
      %v452 = vpop.f32.mrb[0].mxu0
      %453 = vmatprep.mubr.f32.mxu0 0.0
      %454 = vmatmul.mubr.f32.gmra.mrb[0].mxu0 %v333
      %v455 = vpop.f32.mrb[0].mxu0
      %v456 = vadd.f32 0.0, %v455
      %v457 = vpop.f32.mrb[0].mxu0
      %458 = vmatprep.mubr.f32.mxu0 0.0
      %459 = vmatmul.mubr.f32.gmra.mrb[0].mxu0 %v334
      %v460 = vpop.f32.mrb[0].mxu0
      %v461 = vadd.f32 0.0, %v460
      %v462 = vpop.f32.mrb[0].mxu0
      %463 = vmatprep.mubr.f32.mxu0 0.0
      %464 = vmatmul.mubr.f32.gmra.mrb[0].mxu0 %v335
      %v465 = vpop.f32.mrb[0].mxu0
      %v466 = vadd.f32 0.0, %v465
      %v467 = vpop.f32.mrb[0].mxu0
      %468 = vmatprep.mubr.f32.mxu0 0.0
      %469 = vmatmul.mubr.f32.gmra.mrb[0].mxu0 %v336
      %v470 = vpop.f32.mrb[0].mxu0
      %v471 = vadd.f32 0.0, %v470
      %v472 = vpop.f32.mrb[0].mxu0
      %473 = vmatprep.mubr.f32.mxu0 0.0
      %474 = vmatmul.mubr.f32.gmra.mrb[0].mxu0 %v337
      %v475 = vpop.f32.mrb[0].mxu0
      %v476 = vadd.f32 0.0, %v475
      %v477 = vpop.f32.mrb[0].mxu0
      %478 = vmatprep.mubr.f32.mxu0 0.0
      %479 = vmatmul.mubr.f32.gmra.mrb[0].mxu0 %v338
      %v480 = vpop.f32.mrb[0].mxu0
      %v481 = vadd.f32 0.0, %v480
      %v482 = vpop.f32.mrb[0].mxu0
      %483 = vmatprep.mubr.f32.mxu0 0.0
      %484 = vmatmul.mubr.f32.gmra.mrb[0].mxu0 %v339
      %v485 = vpop.f32.mrb[0].mxu0
      %v486 = vadd.f32 0.0, %v485
      %v487 = vpop.f32.mrb[0].mxu0
      %488 = vmatprep.mubr.f32.mxu0 0.0
      %489 = vmatmul.mubr.f32.gmra.mrb[0].mxu0 %v340
      %v490 = vpop.f32.mrb[0].mxu0
      %v491 = vadd.f32 0.0, %v490
      %v492 = vpop.f32.mrb[0].mxu0
      %493 = vmatprep.mubr.f32.mxu0 0.0
      %494 = vmatmul.mubr.f32.gmra.mrb[0].mxu0 %v341
      %v495 = vpop.f32.mrb[0].mxu0
      %v496 = vadd.f32 0.0, %v495
      %v497 = vpop.f32.mrb[0].mxu0
      %498 = vmatprep.mubr.f32.mxu0 0.0
      %499 = vmatmul.mubr.f32.gmra.mrb[0].mxu0 %v342
      %v500 = vpop.f32.mrb[0].mxu0
      %v501 = vadd.f32 0.0, %v500
      %v502 = vpop.f32.mrb[0].mxu0
      %503 = vmatprep.mubr.f32.mxu0 0.0
      %504 = vmatmul.mubr.f32.gmra.mrb[0].mxu0 %v343
      %v505 = vpop.f32.mrb[0].mxu0
      %v506 = vadd.f32 0.0, %v505
      %v507 = vpop.f32.mrb[0].mxu0
      %508 = vmatprep.mubr.f32.mxu0 0.0
      %509 = vmatmul.mubr.f32.gmra.mrb[0].mxu0 %v344
      %v510 = vpop.f32.mrb[0].mxu0
      %v511 = vadd.f32 0.0, %v510
      %v512 = vpop.f32.mrb[0].mxu0
      %513 = vmatprep.mubr.f32.mxu0 0.0
      %514 = vmatmul.mubr.f32.gmra.mrb[0].mxu0 %v345
      %v515 = vpop.f32.mrb[0].mxu0
      %v516 = vadd.f32 0.0, %v515
      %v517 = vpop.f32.mrb[0].mxu0
      %518 = vmatprep.mubr.f32.mxu0 0.0
      %519 = vmatmul.mubr.f32.gmra.mrb[0].mxu0 %v346
      %v520 = vpop.f32.mrb[0].mxu0
      %v521 = vadd.f32 0.0, %v520
      %v522 = vpop.f32.mrb[0].mxu0
      %523 = vdwg.mxu0
      %v524 = vld [vmem:[%s5] sm:$0x1]
      %v525 = vlaneseq
      %v526 = vshrl.u32 %v525, 7
      %v527 = vsub.s32 0, %v526
      %v528 = vrot.slane %v524, %v527
      %v529 = vmul.f32 %v446, %v528
      %v530 = vmul.f32 %v451, %v528
      %v531 = vmul.f32 %v456, %v528
      %v532 = vmul.f32 %v461, %v528
      %v533 = vmul.f32 %v466, %v528
      %v534 = vmul.f32 %v471, %v528
      %v535 = vmul.f32 %v476, %v528
      %v536 = vmul.f32 %v481, %v528
      %v537 = vmul.f32 %v486, %v528
      %v538 = vmul.f32 %v491, %v528
      %v539 = vmul.f32 %v496, %v528
      %v540 = vmul.f32 %v501, %v528
      %v541 = vmul.f32 %v506, %v528
      %v542 = vmul.f32 %v511, %v528
      %v543 = vmul.f32 %v516, %v528
      %v544 = vmul.f32 %v521, %v528
      %v545 = vld [vmem:[%s5 + $0x1] sm:$0x1]
      %v546 = vlaneseq
      %v547 = vshrl.u32 %v546, 7
      %v548 = vsub.s32 0, %v547
      %v549 = vrot.slane %v545, %v548
      %v550 = vadd.f32 %v529, %v549
      %v551 = vadd.f32 %v530, %v549
      %v552 = vadd.f32 %v531, %v549
      %v553 = vadd.f32 %v532, %v549
      %v554 = vadd.f32 %v533, %v549
      %v555 = vadd.f32 %v534, %v549
      %v556 = vadd.f32 %v535, %v549
      %v557 = vadd.f32 %v536, %v549
      %v558 = vadd.f32 %v537, %v549
      %v559 = vadd.f32 %v538, %v549
      %v560 = vadd.f32 %v539, %v549
      %v561 = vadd.f32 %v540, %v549
      %v562 = vadd.f32 %v541, %v549
      %v563 = vadd.f32 %v542, %v549
      %v564 = vadd.f32 %v543, %v549
      %v565 = vadd.f32 %v544, %v549
      %v566 = vmax.f32 %v550, 0.0
      %v567 = vmax.f32 %v551, 0.0
      %v568 = vmax.f32 %v552, 0.0
      %v569 = vmax.f32 %v553, 0.0
      %v570 = vmax.f32 %v554, 0.0
      %v571 = vmax.f32 %v555, 0.0
      %v572 = vmax.f32 %v556, 0.0
      %v573 = vmax.f32 %v557, 0.0
      %v574 = vmax.f32 %v558, 0.0
      %v575 = vmax.f32 %v559, 0.0
      %v576 = vmax.f32 %v560, 0.0
      %v577 = vmax.f32 %v561, 0.0
      %v578 = vmax.f32 %v562, 0.0
      %v579 = vmax.f32 %v563, 0.0
      %v580 = vmax.f32 %v564, 0.0
      %v581 = vmax.f32 %v565, 0.0
      %v582 = vld [vmem:[%s3] sm:$0xff]
      %v583 = vld [vmem:[%s3 + $0x8] sm:$0xff]
      %v584 = vld [vmem:[%s3 + $0x10] sm:$0xff]
      %v585 = vld [vmem:[%s3 + $0x18] sm:$0xff]
      %v586 = vld [vmem:[%s3 + $0x20] sm:$0xff]
      %v587 = vld [vmem:[%s3 + $0x28] sm:$0xff]
      %v588 = vld [vmem:[%s3 + $0x30] sm:$0xff]
      %v589 = vld [vmem:[%s3 + $0x38] sm:$0xff]
      %v590 = vld [vmem:[%s3 + $0x40] sm:$0xff]
      %v591 = vld [vmem:[%s3 + $0x48] sm:$0xff]
      %v592 = vld [vmem:[%s3 + $0x50] sm:$0xff]
      %v593 = vld [vmem:[%s3 + $0x58] sm:$0xff]
      %v594 = vld [vmem:[%s3 + $0x60] sm:$0xff]
      %v595 = vld [vmem:[%s3 + $0x68] sm:$0xff]
      %v596 = vld [vmem:[%s3 + $0x70] sm:$0xff]
      %v597 = vld [vmem:[%s3 + $0x78] sm:$0xff]
      %v598 = vld [vmem:[%s5 + $0x2] sm:$0x1]
      %v599 = vlaneseq
      %v600 = vshrl.u32 %v599, 7
      %v601 = vsub.s32 0, %v600
      %v602 = vrot.slane %v598, %v601
      %603 = vmatprep.subr.mxu0 0.0
      %604 = vmatpush1.msra.mxu0 %v582
      %605 = vmatprep.subr.mxu0 0.0
      %606 = vmatpush1.msra.mxu0 %v583
      %607 = vmatprep.subr.mxu0 0.0
      %608 = vmatpush1.msra.mxu0 %v584
      %609 = vmatprep.subr.mxu0 0.0
      %610 = vmatpush1.msra.mxu0 %v585
      %611 = vmatprep.subr.mxu0 0.0
      %612 = vmatpush1.msra.mxu0 %v586
      %613 = vmatprep.subr.mxu0 0.0
      %614 = vmatpush1.msra.mxu0 %v587
      %615 = vmatprep.subr.mxu0 0.0
      %616 = vmatpush1.msra.mxu0 %v588
      %617 = vmatprep.subr.mxu0 0.0
      %618 = vmatpush1.msra.mxu0 %v589
      %619 = vmatprep.subr.mxu0 0.0
      %620 = vmatpush1.msra.mxu0 %v590
      %621 = vmatprep.subr.mxu0 0.0
      %622 = vmatpush1.msra.mxu0 %v591
      %623 = vmatprep.subr.mxu0 0.0
      %624 = vmatpush1.msra.mxu0 %v592
      %625 = vmatprep.subr.mxu0 0.0
      %626 = vmatpush1.msra.mxu0 %v593
      %627 = vmatprep.subr.mxu0 0.0
      %628 = vmatpush1.msra.mxu0 %v594
      %629 = vmatprep.subr.mxu0 0.0
      %630 = vmatpush1.msra.mxu0 %v595
      %631 = vmatprep.subr.mxu0 0.0
      %632 = vmatpush1.msra.mxu0 %v596
      %633 = vmatprep.subr.mxu0 0.0
      %634 = vmatpush1.msra.mxu0 %v597
      %635 = vmatprep.subr.mxu0 0.0
      %636 = vmatpush1.msra.mxu0 0.0
      %637 = vmatprep.subr.mxu0 0.0
      %638 = vmatpush1.msra.mxu0 0.0
      %639 = vmatprep.subr.mxu0 0.0
      %640 = vmatpush1.msra.mxu0 0.0
      %641 = vmatprep.subr.mxu0 0.0
      %642 = vmatpush1.msra.mxu0 0.0
      %643 = vmatprep.subr.mxu0 0.0
      %644 = vmatpush1.msra.mxu0 0.0
      %645 = vmatprep.subr.mxu0 0.0
      %646 = vmatpush1.msra.mxu0 0.0
      %647 = vmatprep.subr.mxu0 0.0
      %648 = vmatpush1.msra.mxu0 0.0
      %649 = vmatprep.subr.mxu0 0.0
      %650 = vmatpush1.msra.mxu0 0.0
      %651 = vmatprep.subr.mxu0 0.0
      %652 = vmatpush1.msra.mxu0 0.0
      %653 = vmatprep.subr.mxu0 0.0
      %654 = vmatpush1.msra.mxu0 0.0
      %655 = vmatprep.subr.mxu0 0.0
      %656 = vmatpush1.msra.mxu0 0.0
      %657 = vmatprep.subr.mxu0 0.0
      %658 = vmatpush1.msra.mxu0 0.0
      %659 = vmatprep.subr.mxu0 0.0
      %660 = vmatpush1.msra.mxu0 0.0
      %661 = vmatprep.subr.mxu0 0.0
      %662 = vmatpush1.msra.mxu0 0.0
      %663 = vmatprep.subr.mxu0 0.0
      %664 = vmatpush1.msra.mxu0 0.0
      %665 = vmatprep.subr.mxu0 0.0
      %666 = vmatpush1.msra.mxu0 0.0
      %667 = vmatprep.mubr.f32.mxu0 0.0
      %668 = vmatmul.mubr.f32.gmra.mrb[0].mxu0 %v566
      %v669 = vpop.f32.mrb[0].mxu0
      %v670 = vadd.f32 %v602, %v669
      %v671 = vpop.f32.mrb[0].mxu0
      %672 = vmatprep.mubr.f32.mxu0 0.0
      %673 = vmatmul.mubr.f32.gmra.mrb[0].mxu0 %v567
      %v674 = vpop.f32.mrb[0].mxu0
      %v675 = vadd.f32 %v602, %v674
      %v676 = vpop.f32.mrb[0].mxu0
      %677 = vmatprep.mubr.f32.mxu0 0.0
      %678 = vmatmul.mubr.f32.gmra.mrb[0].mxu0 %v568
      %v679 = vpop.f32.mrb[0].mxu0
      %v680 = vadd.f32 %v602, %v679
      %v681 = vpop.f32.mrb[0].mxu0
      %682 = vmatprep.mubr.f32.mxu0 0.0
      %683 = vmatmul.mubr.f32.gmra.mrb[0].mxu0 %v569
      %v684 = vpop.f32.mrb[0].mxu0
      %v685 = vadd.f32 %v602, %v684
      %v686 = vpop.f32.mrb[0].mxu0
      %687 = vmatprep.mubr.f32.mxu0 0.0
      %688 = vmatmul.mubr.f32.gmra.mrb[0].mxu0 %v570
      %v689 = vpop.f32.mrb[0].mxu0
      %v690 = vadd.f32 %v602, %v689
      %v691 = vpop.f32.mrb[0].mxu0
      %692 = vmatprep.mubr.f32.mxu0 0.0
      %693 = vmatmul.mubr.f32.gmra.mrb[0].mxu0 %v571
      %v694 = vpop.f32.mrb[0].mxu0
      %v695 = vadd.f32 %v602, %v694
      %v696 = vpop.f32.mrb[0].mxu0
      %697 = vmatprep.mubr.f32.mxu0 0.0
      %698 = vmatmul.mubr.f32.gmra.mrb[0].mxu0 %v572
      %v699 = vpop.f32.mrb[0].mxu0
      %v700 = vadd.f32 %v602, %v699
      %v701 = vpop.f32.mrb[0].mxu0
      %702 = vmatprep.mubr.f32.mxu0 0.0
      %703 = vmatmul.mubr.f32.gmra.mrb[0].mxu0 %v573
      %v704 = vpop.f32.mrb[0].mxu0
      %v705 = vadd.f32 %v602, %v704
      %v706 = vpop.f32.mrb[0].mxu0
      %707 = vmatprep.mubr.f32.mxu0 0.0
      %708 = vmatmul.mubr.f32.gmra.mrb[0].mxu0 %v574
      %v709 = vpop.f32.mrb[0].mxu0
      %v710 = vadd.f32 %v602, %v709
      %v711 = vpop.f32.mrb[0].mxu0
      %712 = vmatprep.mubr.f32.mxu0 0.0
      %713 = vmatmul.mubr.f32.gmra.mrb[0].mxu0 %v575
      %v714 = vpop.f32.mrb[0].mxu0
      %v715 = vadd.f32 %v602, %v714
      %v716 = vpop.f32.mrb[0].mxu0
      %717 = vmatprep.mubr.f32.mxu0 0.0
      %718 = vmatmul.mubr.f32.gmra.mrb[0].mxu0 %v576
      %v719 = vpop.f32.mrb[0].mxu0
      %v720 = vadd.f32 %v602, %v719
      %v721 = vpop.f32.mrb[0].mxu0
      %722 = vmatprep.mubr.f32.mxu0 0.0
      %723 = vmatmul.mubr.f32.gmra.mrb[0].mxu0 %v577
      %v724 = vpop.f32.mrb[0].mxu0
      %v725 = vadd.f32 %v602, %v724
      %v726 = vpop.f32.mrb[0].mxu0
      %727 = vmatprep.mubr.f32.mxu0 0.0
      %728 = vmatmul.mubr.f32.gmra.mrb[0].mxu0 %v578
      %v729 = vpop.f32.mrb[0].mxu0
      %v730 = vadd.f32 %v602, %v729
      %v731 = vpop.f32.mrb[0].mxu0
      %732 = vmatprep.mubr.f32.mxu0 0.0
      %733 = vmatmul.mubr.f32.gmra.mrb[0].mxu0 %v579
      %v734 = vpop.f32.mrb[0].mxu0
      %v735 = vadd.f32 %v602, %v734
      %v736 = vpop.f32.mrb[0].mxu0
      %737 = vmatprep.mubr.f32.mxu0 0.0
      %738 = vmatmul.mubr.f32.gmra.mrb[0].mxu0 %v580
      %v739 = vpop.f32.mrb[0].mxu0
      %v740 = vadd.f32 %v602, %v739
      %v741 = vpop.f32.mrb[0].mxu0
      %742 = vmatprep.mubr.f32.mxu0 0.0
      %743 = vmatmul.mubr.f32.gmra.mrb[0].mxu0 %v581
      %v744 = vpop.f32.mrb[0].mxu0
      %v745 = vadd.f32 %v602, %v744
      %v746 = vpop.f32.mrb[0].mxu0
      %747 = vdwg.mxu0
      %v748 = vld [vmem:[%s4] sm:$0xff]
      %v749 = vld [vmem:[%s4 + $0x8] sm:$0xff]
      %v750 = vld [vmem:[%s4 + $0x10] sm:$0xff]
      %v751 = vld [vmem:[%s4 + $0x18] sm:$0xff]
      %v752 = vld [vmem:[%s4 + $0x20] sm:$0xff]
      %v753 = vld [vmem:[%s4 + $0x28] sm:$0xff]
      %v754 = vld [vmem:[%s4 + $0x30] sm:$0xff]
      %v755 = vld [vmem:[%s4 + $0x38] sm:$0xff]
      %v756 = vld [vmem:[%s4 + $0x40] sm:$0xff]
      %v757 = vld [vmem:[%s4 + $0x48] sm:$0xff]
      %v758 = vld [vmem:[%s4 + $0x50] sm:$0xff]
      %v759 = vld [vmem:[%s4 + $0x58] sm:$0xff]
      %v760 = vld [vmem:[%s4 + $0x60] sm:$0xff]
      %v761 = vld [vmem:[%s4 + $0x68] sm:$0xff]
      %v762 = vld [vmem:[%s4 + $0x70] sm:$0xff]
      %v763 = vld [vmem:[%s4 + $0x78] sm:$0xff]
      %764 = vmatprep.subr.mxu0 0.0
      %765 = vmatpush1.msra.mxu0 %v748
      %766 = vmatprep.subr.mxu0 0.0
      %767 = vmatpush1.msra.mxu0 %v749
      %768 = vmatprep.subr.mxu0 0.0
      %769 = vmatpush1.msra.mxu0 %v750
      %770 = vmatprep.subr.mxu0 0.0
      %771 = vmatpush1.msra.mxu0 %v751
      %772 = vmatprep.subr.mxu0 0.0
      %773 = vmatpush1.msra.mxu0 %v752
      %774 = vmatprep.subr.mxu0 0.0
      %775 = vmatpush1.msra.mxu0 %v753
      %776 = vmatprep.subr.mxu0 0.0
      %777 = vmatpush1.msra.mxu0 %v754
      %778 = vmatprep.subr.mxu0 0.0
      %779 = vmatpush1.msra.mxu0 %v755
      %780 = vmatprep.subr.mxu0 0.0
      %781 = vmatpush1.msra.mxu0 %v756
      %782 = vmatprep.subr.mxu0 0.0
      %783 = vmatpush1.msra.mxu0 %v757
      %784 = vmatprep.subr.mxu0 0.0
      %785 = vmatpush1.msra.mxu0 %v758
      %786 = vmatprep.subr.mxu0 0.0
      %787 = vmatpush1.msra.mxu0 %v759
      %788 = vmatprep.subr.mxu0 0.0
      %789 = vmatpush1.msra.mxu0 %v760
      %790 = vmatprep.subr.mxu0 0.0
      %791 = vmatpush1.msra.mxu0 %v761
      %792 = vmatprep.subr.mxu0 0.0
      %793 = vmatpush1.msra.mxu0 %v762
      %794 = vmatprep.subr.mxu0 0.0
      %795 = vmatpush1.msra.mxu0 %v763
      %796 = vmatprep.subr.mxu0 0.0
      %797 = vmatpush1.msra.mxu0 0.0
      %798 = vmatprep.subr.mxu0 0.0
      %799 = vmatpush1.msra.mxu0 0.0
      %800 = vmatprep.subr.mxu0 0.0
      %801 = vmatpush1.msra.mxu0 0.0
      %802 = vmatprep.subr.mxu0 0.0
      %803 = vmatpush1.msra.mxu0 0.0
      %804 = vmatprep.subr.mxu0 0.0
      %805 = vmatpush1.msra.mxu0 0.0
      %806 = vmatprep.subr.mxu0 0.0
      %807 = vmatpush1.msra.mxu0 0.0
      %808 = vmatprep.subr.mxu0 0.0
      %809 = vmatpush1.msra.mxu0 0.0
      %810 = vmatprep.subr.mxu0 0.0
      %811 = vmatpush1.msra.mxu0 0.0
      %812 = vmatprep.subr.mxu0 0.0
      %813 = vmatpush1.msra.mxu0 0.0
      %814 = vmatprep.subr.mxu0 0.0
      %815 = vmatpush1.msra.mxu0 0.0
      %816 = vmatprep.subr.mxu0 0.0
      %817 = vmatpush1.msra.mxu0 0.0
      %818 = vmatprep.subr.mxu0 0.0
      %819 = vmatpush1.msra.mxu0 0.0
      %820 = vmatprep.subr.mxu0 0.0
      %821 = vmatpush1.msra.mxu0 0.0
      %822 = vmatprep.subr.mxu0 0.0
      %823 = vmatpush1.msra.mxu0 0.0
      %824 = vmatprep.subr.mxu0 0.0
      %825 = vmatpush1.msra.mxu0 0.0
      %826 = vmatprep.subr.mxu0 0.0
      %827 = vmatpush1.msra.mxu0 0.0
      %828 = vmatprep.mubr.f32.mxu0 0.0
      %829 = vmatmul.mubr.f32.gmra.mrb[0].mxu0 %v331
      %v830 = vpop.f32.mrb[0].mxu0
      %v831 = vadd.f32 0.0, %v830
      %v832 = vpop.f32.mrb[0].mxu0
      %833 = vmatprep.mubr.f32.mxu0 0.0
      %834 = vmatmul.mubr.f32.gmra.mrb[0].mxu0 %v332
      %v835 = vpop.f32.mrb[0].mxu0
      %v836 = vadd.f32 0.0, %v835
      %v837 = vpop.f32.mrb[0].mxu0
      %838 = vmatprep.mubr.f32.mxu0 0.0
      %839 = vmatmul.mubr.f32.gmra.mrb[0].mxu0 %v333
      %v840 = vpop.f32.mrb[0].mxu0
      %v841 = vadd.f32 0.0, %v840
      %v842 = vpop.f32.mrb[0].mxu0
      %843 = vmatprep.mubr.f32.mxu0 0.0
      %844 = vmatmul.mubr.f32.gmra.mrb[0].mxu0 %v334
      %v845 = vpop.f32.mrb[0].mxu0
      %v846 = vadd.f32 0.0, %v845
      %v847 = vpop.f32.mrb[0].mxu0
      %848 = vmatprep.mubr.f32.mxu0 0.0
      %849 = vmatmul.mubr.f32.gmra.mrb[0].mxu0 %v335
      %v850 = vpop.f32.mrb[0].mxu0
      %v851 = vadd.f32 0.0, %v850
      %v852 = vpop.f32.mrb[0].mxu0
      %853 = vmatprep.mubr.f32.mxu0 0.0
      %854 = vmatmul.mubr.f32.gmra.mrb[0].mxu0 %v336
      %v855 = vpop.f32.mrb[0].mxu0
      %v856 = vadd.f32 0.0, %v855
      %v857 = vpop.f32.mrb[0].mxu0
      %858 = vmatprep.mubr.f32.mxu0 0.0
      %859 = vmatmul.mubr.f32.gmra.mrb[0].mxu0 %v337
      %v860 = vpop.f32.mrb[0].mxu0
      %v861 = vadd.f32 0.0, %v860
      %v862 = vpop.f32.mrb[0].mxu0
      %863 = vmatprep.mubr.f32.mxu0 0.0
      %864 = vmatmul.mubr.f32.gmra.mrb[0].mxu0 %v338
      %v865 = vpop.f32.mrb[0].mxu0
      %v866 = vadd.f32 0.0, %v865
      %v867 = vpop.f32.mrb[0].mxu0
      %868 = vmatprep.mubr.f32.mxu0 0.0
      %869 = vmatmul.mubr.f32.gmra.mrb[0].mxu0 %v339
      %v870 = vpop.f32.mrb[0].mxu0
      %v871 = vadd.f32 0.0, %v870
      %v872 = vpop.f32.mrb[0].mxu0
      %873 = vmatprep.mubr.f32.mxu0 0.0
      %874 = vmatmul.mubr.f32.gmra.mrb[0].mxu0 %v340
      %v875 = vpop.f32.mrb[0].mxu0
      %v876 = vadd.f32 0.0, %v875
      %v877 = vpop.f32.mrb[0].mxu0
      %878 = vmatprep.mubr.f32.mxu0 0.0
      %879 = vmatmul.mubr.f32.gmra.mrb[0].mxu0 %v341
      %v880 = vpop.f32.mrb[0].mxu0
      %v881 = vadd.f32 0.0, %v880
      %v882 = vpop.f32.mrb[0].mxu0
      %883 = vmatprep.mubr.f32.mxu0 0.0
      %884 = vmatmul.mubr.f32.gmra.mrb[0].mxu0 %v342
      %v885 = vpop.f32.mrb[0].mxu0
      %v886 = vadd.f32 0.0, %v885
      %v887 = vpop.f32.mrb[0].mxu0
      %888 = vmatprep.mubr.f32.mxu0 0.0
      %889 = vmatmul.mubr.f32.gmra.mrb[0].mxu0 %v343
      %v890 = vpop.f32.mrb[0].mxu0
      %v891 = vadd.f32 0.0, %v890
      %v892 = vpop.f32.mrb[0].mxu0
      %893 = vmatprep.mubr.f32.mxu0 0.0
      %894 = vmatmul.mubr.f32.gmra.mrb[0].mxu0 %v344
      %v895 = vpop.f32.mrb[0].mxu0
      %v896 = vadd.f32 0.0, %v895
      %v897 = vpop.f32.mrb[0].mxu0
      %898 = vmatprep.mubr.f32.mxu0 0.0
      %899 = vmatmul.mubr.f32.gmra.mrb[0].mxu0 %v345
      %v900 = vpop.f32.mrb[0].mxu0
      %v901 = vadd.f32 0.0, %v900
      %v902 = vpop.f32.mrb[0].mxu0
      %903 = vmatprep.mubr.f32.mxu0 0.0
      %904 = vmatmul.mubr.f32.gmra.mrb[0].mxu0 %v346
      %v905 = vpop.f32.mrb[0].mxu0
      %v906 = vadd.f32 0.0, %v905
      %v907 = vpop.f32.mrb[0].mxu0
      %908 = vdwg.mxu0
      %v909 = vmul.f32 %v347, %v670
      %v910 = vmul.f32 %v348, %v675
      %v911 = vmul.f32 %v349, %v680
      %v912 = vmul.f32 %v350, %v685
      %v913 = vmul.f32 %v351, %v690
      %v914 = vmul.f32 %v352, %v695
      %v915 = vmul.f32 %v353, %v700
      %v916 = vmul.f32 %v354, %v705
      %v917 = vmul.f32 %v355, %v710
      %v918 = vmul.f32 %v356, %v715
      %v919 = vmul.f32 %v357, %v720
      %v920 = vmul.f32 %v358, %v725
      %v921 = vmul.f32 %v359, %v730
      %v922 = vmul.f32 %v360, %v735
      %v923 = vmul.f32 %v361, %v740
      %v924 = vmul.f32 %v362, %v745
      %v925 = vadd.f32 %v909, %v831
      %v926 = vadd.f32 %v910, %v836
      %v927 = vadd.f32 %v911, %v841
      %v928 = vadd.f32 %v912, %v846
      %v929 = vadd.f32 %v913, %v851
      %v930 = vadd.f32 %v914, %v856
      %v931 = vadd.f32 %v915, %v861
      %v932 = vadd.f32 %v916, %v866
      %v933 = vadd.f32 %v917, %v871
      %v934 = vadd.f32 %v918, %v876
      %v935 = vadd.f32 %v919, %v881
      %v936 = vadd.f32 %v920, %v886
      %v937 = vadd.f32 %v921, %v891
      %v938 = vadd.f32 %v922, %v896
      %v939 = vadd.f32 %v923, %v901
      %v940 = vadd.f32 %v924, %v906
      %v941 = vld [vmem:[%s5 + $0x3] sm:$0x1]
      %v942 = vlaneseq
      %v943 = vshrl.u32 %v942, 7
      %v944 = vsub.s32 0, %v943
      %v945 = vrot.slane %v941, %v944
      %v946 = vadd.f32 %v925, %v945
      %v947 = vadd.f32 %v926, %v945
      %v948 = vadd.f32 %v927, %v945
      %v949 = vadd.f32 %v928, %v945
      %v950 = vadd.f32 %v929, %v945
      %v951 = vadd.f32 %v930, %v945
      %v952 = vadd.f32 %v931, %v945
      %v953 = vadd.f32 %v932, %v945
      %v954 = vadd.f32 %v933, %v945
      %v955 = vadd.f32 %v934, %v945
      %v956 = vadd.f32 %v935, %v945
      %v957 = vadd.f32 %v936, %v945
      %v958 = vadd.f32 %v937, %v945
      %v959 = vadd.f32 %v938, %v945
      %v960 = vadd.f32 %v939, %v945
      %v961 = vadd.f32 %v940, %v945
      %v962 = vmax.f32 %v946, 0.0
      %v963 = vmax.f32 %v947, 0.0
      %v964 = vmax.f32 %v948, 0.0
      %v965 = vmax.f32 %v949, 0.0
      %v966 = vmax.f32 %v950, 0.0
      %v967 = vmax.f32 %v951, 0.0
      %v968 = vmax.f32 %v952, 0.0
      %v969 = vmax.f32 %v953, 0.0
      %v970 = vmax.f32 %v954, 0.0
      %v971 = vmax.f32 %v955, 0.0
      %v972 = vmax.f32 %v956, 0.0
      %v973 = vmax.f32 %v957, 0.0
      %v974 = vmax.f32 %v958, 0.0
      %v975 = vmax.f32 %v959, 0.0
      %v976 = vmax.f32 %v960, 0.0
      %v977 = vmax.f32 %v961, 0.0
      %v978 = vld [vmem:[%s6] sm:$0xff]
      %v979 = vld [vmem:[%s6 + $0x8] sm:$0xff]
      %v980 = vld [vmem:[%s6 + $0x10] sm:$0xff]
      %v981 = vld [vmem:[%s6 + $0x18] sm:$0xff]
      %v982 = vld [vmem:[%s6 + $0x20] sm:$0xff]
      %v983 = vld [vmem:[%s6 + $0x28] sm:$0xff]
      %v984 = vld [vmem:[%s6 + $0x30] sm:$0xff]
      %v985 = vld [vmem:[%s6 + $0x38] sm:$0xff]
      %v986 = vld [vmem:[%s6 + $0x40] sm:$0xff]
      %v987 = vld [vmem:[%s6 + $0x48] sm:$0xff]
      %v988 = vld [vmem:[%s6 + $0x50] sm:$0xff]
      %v989 = vld [vmem:[%s6 + $0x58] sm:$0xff]
      %v990 = vld [vmem:[%s6 + $0x60] sm:$0xff]
      %v991 = vld [vmem:[%s6 + $0x68] sm:$0xff]
      %v992 = vld [vmem:[%s6 + $0x70] sm:$0xff]
      %v993 = vld [vmem:[%s6 + $0x78] sm:$0xff]
      %v994 = vld [vmem:[%s7] sm:$0x1]
      %v996 = vlaneseq
      %v997 = vshrl.u32 %v996, 7
      %v998 = vsub.s32 0, %v997
      %v999 = vrot.slane %v994, %v998
      %1001 = vmatprep.subr.mxu0 0.0
      %1002 = vmatpush1.msra.mxu0 %v978
      %1003 = vmatprep.subr.mxu0 0.0
      %1004 = vmatpush1.msra.mxu0 %v979
      %1005 = vmatprep.subr.mxu0 0.0
      %1006 = vmatpush1.msra.mxu0 %v980
      %1007 = vmatprep.subr.mxu0 0.0
      %1008 = vmatpush1.msra.mxu0 %v981
      %1009 = vmatprep.subr.mxu0 0.0
      %1010 = vmatpush1.msra.mxu0 %v982
      %1011 = vmatprep.subr.mxu0 0.0
      %1012 = vmatpush1.msra.mxu0 %v983
      %1013 = vmatprep.subr.mxu0 0.0
      %1014 = vmatpush1.msra.mxu0 %v984
      %1015 = vmatprep.subr.mxu0 0.0
      %1016 = vmatpush1.msra.mxu0 %v985
      %1017 = vmatprep.subr.mxu0 0.0
      %1018 = vmatpush1.msra.mxu0 %v986
      %1019 = vmatprep.subr.mxu0 0.0
      %1020 = vmatpush1.msra.mxu0 %v987
      %1021 = vmatprep.subr.mxu0 0.0
      %1022 = vmatpush1.msra.mxu0 %v988
      %1023 = vmatprep.subr.mxu0 0.0
      %1024 = vmatpush1.msra.mxu0 %v989
      %1025 = vmatprep.subr.mxu0 0.0
      %1026 = vmatpush1.msra.mxu0 %v990
      %1027 = vmatprep.subr.mxu0 0.0
      %1028 = vmatpush1.msra.mxu0 %v991
      %1029 = vmatprep.subr.mxu0 0.0
      %1030 = vmatpush1.msra.mxu0 %v992
      %1031 = vmatprep.subr.mxu0 0.0
      %1032 = vmatpush1.msra.mxu0 %v993
      %1033 = vmatprep.subr.mxu0 0.0
      %1034 = vmatpush1.msra.mxu0 0.0
      %1035 = vmatprep.subr.mxu0 0.0
      %1036 = vmatpush1.msra.mxu0 0.0
      %1037 = vmatprep.subr.mxu0 0.0
      %1038 = vmatpush1.msra.mxu0 0.0
      %1039 = vmatprep.subr.mxu0 0.0
      %1040 = vmatpush1.msra.mxu0 0.0
      %1041 = vmatprep.subr.mxu0 0.0
      %1042 = vmatpush1.msra.mxu0 0.0
      %1043 = vmatprep.subr.mxu0 0.0
      %1044 = vmatpush1.msra.mxu0 0.0
      %1045 = vmatprep.subr.mxu0 0.0
      %1046 = vmatpush1.msra.mxu0 0.0
      %1047 = vmatprep.subr.mxu0 0.0
      %1048 = vmatpush1.msra.mxu0 0.0
      %1049 = vmatprep.subr.mxu0 0.0
      %1050 = vmatpush1.msra.mxu0 0.0
      %1051 = vmatprep.subr.mxu0 0.0
      %1052 = vmatpush1.msra.mxu0 0.0
      %1053 = vmatprep.subr.mxu0 0.0
      %1054 = vmatpush1.msra.mxu0 0.0
      %1055 = vmatprep.subr.mxu0 0.0
      %1056 = vmatpush1.msra.mxu0 0.0
      %1057 = vmatprep.subr.mxu0 0.0
      %1058 = vmatpush1.msra.mxu0 0.0
      %1059 = vmatprep.subr.mxu0 0.0
      %1060 = vmatpush1.msra.mxu0 0.0
      %1061 = vmatprep.subr.mxu0 0.0
      %1062 = vmatpush1.msra.mxu0 0.0
      %1063 = vmatprep.subr.mxu0 0.0
      %1064 = vmatpush1.msra.mxu0 0.0
      %1065 = vmatprep.mubr.f32.mxu0 0.0
      %1066 = vmatmul.mubr.f32.gmra.mrb[0].mxu0 %v962
      %v1067 = vpop.f32.mrb[0].mxu0
      %v1068 = vadd.f32 %v999, %v1067
      %v1069 = vpop.f32.mrb[0].mxu0
      %1070 = vmatprep.mubr.f32.mxu0 0.0
      %1071 = vmatmul.mubr.f32.gmra.mrb[0].mxu0 %v963
      %v1072 = vpop.f32.mrb[0].mxu0
      %v1073 = vadd.f32 %v999, %v1072
      %v1074 = vpop.f32.mrb[0].mxu0
      %1075 = vmatprep.mubr.f32.mxu0 0.0
      %1076 = vmatmul.mubr.f32.gmra.mrb[0].mxu0 %v964
      %v1077 = vpop.f32.mrb[0].mxu0
      %v1078 = vadd.f32 %v999, %v1077
      %v1079 = vpop.f32.mrb[0].mxu0
      %1080 = vmatprep.mubr.f32.mxu0 0.0
      %1081 = vmatmul.mubr.f32.gmra.mrb[0].mxu0 %v965
      %v1082 = vpop.f32.mrb[0].mxu0
      %v1083 = vadd.f32 %v999, %v1082
      %v1084 = vpop.f32.mrb[0].mxu0
      %1085 = vmatprep.mubr.f32.mxu0 0.0
      %1086 = vmatmul.mubr.f32.gmra.mrb[0].mxu0 %v966
      %v1087 = vpop.f32.mrb[0].mxu0
      %v1088 = vadd.f32 %v999, %v1087
      %v1089 = vpop.f32.mrb[0].mxu0
      %1090 = vmatprep.mubr.f32.mxu0 0.0
      %1091 = vmatmul.mubr.f32.gmra.mrb[0].mxu0 %v967
      %v1092 = vpop.f32.mrb[0].mxu0
      %v1093 = vadd.f32 %v999, %v1092
      %v1094 = vpop.f32.mrb[0].mxu0
      %1095 = vmatprep.mubr.f32.mxu0 0.0
      %1096 = vmatmul.mubr.f32.gmra.mrb[0].mxu0 %v968
      %v1097 = vpop.f32.mrb[0].mxu0
      %v1098 = vadd.f32 %v999, %v1097
      %v1099 = vpop.f32.mrb[0].mxu0
      %1100 = vmatprep.mubr.f32.mxu0 0.0
      %1101 = vmatmul.mubr.f32.gmra.mrb[0].mxu0 %v969
      %v1102 = vpop.f32.mrb[0].mxu0
      %v1103 = vadd.f32 %v999, %v1102
      %v1104 = vpop.f32.mrb[0].mxu0
      %1105 = vmatprep.mubr.f32.mxu0 0.0
      %1106 = vmatmul.mubr.f32.gmra.mrb[0].mxu0 %v970
      %v1107 = vpop.f32.mrb[0].mxu0
      %v1108 = vadd.f32 %v999, %v1107
      %v1109 = vpop.f32.mrb[0].mxu0
      %1110 = vmatprep.mubr.f32.mxu0 0.0
      %1111 = vmatmul.mubr.f32.gmra.mrb[0].mxu0 %v971
      %v1112 = vpop.f32.mrb[0].mxu0
      %v1113 = vadd.f32 %v999, %v1112
      %v1114 = vpop.f32.mrb[0].mxu0
      %1115 = vmatprep.mubr.f32.mxu0 0.0
      %1116 = vmatmul.mubr.f32.gmra.mrb[0].mxu0 %v972
      %v1117 = vpop.f32.mrb[0].mxu0
      %v1118 = vadd.f32 %v999, %v1117
      %v1119 = vpop.f32.mrb[0].mxu0
      %1120 = vmatprep.mubr.f32.mxu0 0.0
      %1121 = vmatmul.mubr.f32.gmra.mrb[0].mxu0 %v973
      %v1122 = vpop.f32.mrb[0].mxu0
      %v1123 = vadd.f32 %v999, %v1122
      %v1124 = vpop.f32.mrb[0].mxu0
      %1125 = vmatprep.mubr.f32.mxu0 0.0
      %1126 = vmatmul.mubr.f32.gmra.mrb[0].mxu0 %v974
      %v1127 = vpop.f32.mrb[0].mxu0
      %v1128 = vadd.f32 %v999, %v1127
      %v1129 = vpop.f32.mrb[0].mxu0
      %1130 = vmatprep.mubr.f32.mxu0 0.0
      %1131 = vmatmul.mubr.f32.gmra.mrb[0].mxu0 %v975
      %v1132 = vpop.f32.mrb[0].mxu0
      %v1133 = vadd.f32 %v999, %v1132
      %v1134 = vpop.f32.mrb[0].mxu0
      %1135 = vmatprep.mubr.f32.mxu0 0.0
      %1136 = vmatmul.mubr.f32.gmra.mrb[0].mxu0 %v976
      %v1137 = vpop.f32.mrb[0].mxu0
      %v1138 = vadd.f32 %v999, %v1137
      %v1139 = vpop.f32.mrb[0].mxu0
      %1140 = vmatprep.mubr.f32.mxu0 0.0
      %1141 = vmatmul.mubr.f32.gmra.mrb[0].mxu0 %v977
      %v1142 = vpop.f32.mrb[0].mxu0
      %v1143 = vadd.f32 %v999, %v1142
      %v1144 = vpop.f32.mrb[0].mxu0
      %1145 = vdwg.mxu0
      %1146 = vst [vmem:[%s329] sm:$0xff] %v1068
      %1147 = vst [vmem:[%s329 + $0x8] sm:$0xff] %v1073
      %1148 = vst [vmem:[%s329 + $0x10] sm:$0xff] %v1078
      %1149 = vst [vmem:[%s329 + $0x18] sm:$0xff] %v1083
      %1150 = vst [vmem:[%s329 + $0x20] sm:$0xff] %v1088
      %1151 = vst [vmem:[%s329 + $0x28] sm:$0xff] %v1093
      %1152 = vst [vmem:[%s329 + $0x30] sm:$0xff] %v1098
      %1153 = vst [vmem:[%s329 + $0x38] sm:$0xff] %v1103
      %1154 = vst [vmem:[%s329 + $0x40] sm:$0xff] %v1108
      %1155 = vst [vmem:[%s329 + $0x48] sm:$0xff] %v1113
      %1156 = vst [vmem:[%s329 + $0x50] sm:$0xff] %v1118
      %1157 = vst [vmem:[%s329 + $0x58] sm:$0xff] %v1123
      %1158 = vst [vmem:[%s329 + $0x60] sm:$0xff] %v1128
      %1159 = vst [vmem:[%s329 + $0x68] sm:$0xff] %v1133
      %1160 = vst [vmem:[%s329 + $0x70] sm:$0xff] %v1138
      %1161 = vst [vmem:[%s329 + $0x78] sm:$0xff] %v1143
      %s1162 = smul.u32 16, %s19
      %p1163 = scmp.lt.s32.totalorder %s1162, 31
      %s1164 = scalar_select %p1163, %s1162, 31
      %s1165 = smul.addr %s1164, 8
      %s1166 = scalar_lea.vmem %s8, %s1165
      // Predicated region
      $region53: #{pgnn_forward.3} parent=51 // pred_check
        %p1167 = pneg %p215
      $region54: #{pgnn_forward.3} parent=51 // pred_check_branch
        %1169 = sbr.rel (%p1167) target = $region56
      $region55: #{pgnn_forward.3} parent=51 // pred_region
        %s1170 = smul.u32 16, %s19
      $region56: #{pgnn_forward.3} parent=51 // pred_fallthru
        _
    $region52: #{pgnn_forward.3} parent=5 // pred_fallthru
      _
    %p1171 = scmp.le.s32.totalorder 2, %s14
    // Predicated region
    $region57: #{pgnn_forward.3} parent=5 // pred_check
      %p1172 = pneg %p1171
    $region58: #{pgnn_forward.3} parent=5 // pred_check_branch
      %1174 = sbr.rel (%p1172) target = $region60
    $region59: #{pgnn_forward.3} parent=5 // pred_region
      %s1175 = ssub.s32 %s14, 2
      // Predicated region
      $region61: #{pgnn_forward.3} parent=59 // pred_check
        %p1176 = pneg %p221
      $region62: #{pgnn_forward.3} parent=59 // pred_check_branch
        %1178 = sbr.rel (%p1176) target = $region64
      $region63: #{pgnn_forward.3} parent=59 // pred_region
        %s1179 = smul.u32 16, %s20
        %p1180 = scmp.lt.s32.totalorder %s1179, 31
        %s1181 = scalar_select %p1180, %s1179, 31
        %s1182 = smul.addr %s1181, 8
        %s1183 = scalar_lea.vmem %s8, %s1182
      $region64: #{pgnn_forward.3} parent=59 // pred_fallthru
        _
    $region60: #{pgnn_forward.3} parent=5 // pred_fallthru
      _
  $region6: #{pgnn_forward.3} parent=0 // loop_footer
    %s18 = sadd.s32 1, %s14
  $region7: #{pgnn_forward.3} parent=0 // loop_footer_branch
    %13 = sbr.rel target = $region3
  $region8: #{pgnn_forward.3} parent=0 // loop_exit
    _

</llo_original>
